<compile_context>
chip_gen: v5e
topology: v5e:2x2
jax: 0.10.0
libtpu: 0.0.40
codegen_flags: <defaults>
</compile_context>

<pallas_src>
import math
import functools

import jax
import jax.numpy as jnp
from jax import lax
from jax.experimental import pallas as pl
from jax.experimental.pallas import tpu as pltpu


# ---------------------------------------------------------------------------
# Small helpers
# ---------------------------------------------------------------------------
def _round_up(x, m):
    return ((x + m - 1) // m) * m


def _gelu_tanh(x):
    # TODO(synk): PyTorch F.gelu default is erf-exact; tanh approximation used
    # inside the kernel (max abs deviation ~1e-3 vs. erf-exact GELU).
    c = math.sqrt(2.0 / math.pi)
    return 0.5 * x * (1.0 + jnp.tanh(c * (x + 0.044715 * x * x * x)))


def _choose_tile(m, target=16384, pref_steps=8):
    """Pick a 128-multiple column tile for the (C, M) matmul kernels.

    Prefers an exact divisor of m (no padding copy) with >= pref_steps grid
    steps so both v7x TensorCores get a pipelined stream; otherwise returns a
    tile requiring m to be padded up to a multiple of it (never a single
    giant unpipelined block that could blow the v7x scoped-VMEM limit)."""
    cap = max(128, min(_round_up(m, 128), _round_up(target, 128)))
    divs = [t for t in range(128, min(cap, m) + 1, 128) if m % t == 0]
    for steps in (pref_steps, 4, 2):
        good = [t for t in divs if m // t >= steps]
        if good:
            return max(good)
    if divs:
        return max(divs)
    # No usable divisor: pad m up to a multiple of this tile in the wrapper.
    return min(cap, max(128, _round_up(-(-m // pref_steps), 128)))


def _choose_blk(n, target=8):
    """Largest divisor of n <= target, preferring >= 2 grid steps."""
    cands = [d for d in range(1, min(target, n) + 1) if n % d == 0]
    good = [d for d in cands if n // d >= 2]
    return max(good) if good else max(cands)


def _vmem_limit(blk_bytes):
    """Scoped-VMEM limit: double-buffered block set + headroom, capped so it
    also fits v7x's 64 MiB physical VMEM."""
    need = 2 * blk_bytes + (4 << 20)
    return int(min(max(need, 32 << 20), 64 << 20))


def _pad_cols(x2d, m_pad):
    m = x2d.shape[1]
    if m_pad == m:
        return x2d
    return jnp.pad(x2d, ((0, 0), (0, m_pad - m)))


# ---------------------------------------------------------------------------
# Pallas kernels (channels-first: out (Cout, tm) = W (Cout,Cin) @ X (Cin,tm))
# ---------------------------------------------------------------------------
def _matmul_bias_kernel(w_ref, x_ref, b_ref, o_ref):
    o_ref[...] = (jnp.dot(w_ref[...], x_ref[...],
                          preferred_element_type=jnp.float32) + b_ref[...])


def _matmul_bias_add_act_kernel(w_ref, x_ref, b_ref, add_ref, o_ref, *,
                                apply_act):
    y = (jnp.dot(w_ref[...], x_ref[...], preferred_element_type=jnp.float32)
         + b_ref[...] + add_ref[...])
    if apply_act:
        y = _gelu_tanh(y)
    o_ref[...] = y


def _spectral_group_kernel(x_ref, w_ref, o_ref):
    # x: (gb, B, G*2Cin), w: (gb, G*2Cin, G*2Cout) block-diagonal per group.
    # One batched MXU matmul per grid step; output is 128-lane dense.
    o_ref[...] = lax.dot_general(
        x_ref[...], w_ref[...],
        dimension_numbers=(((2,), (1,)), ((0,), (0,))),
        preferred_element_type=jnp.float32)


# ---------------------------------------------------------------------------
# Pallas wrappers
# ---------------------------------------------------------------------------
def pallas_linear_cf(w, b, x2d, tm_target=16384):
    """out (Cout, M) = w (Cout, Cin) @ x2d (Cin, M) + b."""
    cout, cin = w.shape
    m = x2d.shape[1]
    tm = _choose_tile(m, tm_target)
    m_pad = _round_up(m, tm)
    xp = _pad_cols(x2d, m_pad)
    blk_bytes = 4 * (cout * cin + cin * tm + cout + cout * tm)
    out = pl.pallas_call(
        _matmul_bias_kernel,
        out_shape=jax.ShapeDtypeStruct((cout, m_pad), jnp.float32),
        grid=(m_pad // tm,),
        in_specs=[pl.BlockSpec((cout, cin), lambda j: (0, 0)),
                  pl.BlockSpec((cin, tm), lambda j: (0, j)),
                  pl.BlockSpec((cout, 1), lambda j: (0, 0))],
        out_specs=pl.BlockSpec((cout, tm), lambda j: (0, j)),
        compiler_params=pltpu.CompilerParams(
            dimension_semantics=("parallel",),
            vmem_limit_bytes=_vmem_limit(blk_bytes)),
        cost_estimate=pl.CostEstimate(
            flops=2 * cout * cin * m_pad,
            transcendentals=0,
            bytes_accessed=4 * (cout * cin + cin * m_pad + cout
                                + cout * m_pad)),
    )(w, xp, b.reshape(cout, 1))
    return out if m_pad == m else out[:, :m]


def pallas_conv1x1_add_act(w, b, x2d, add2d, apply_act, tm_target=16384):
    """Fused 1x1 conv + bias + residual add (+ GELU) in (C, M) layout."""
    cout, cin = w.shape
    m = x2d.shape[1]
    tm = _choose_tile(m, tm_target)
    m_pad = _round_up(m, tm)
    xp = _pad_cols(x2d, m_pad)
    ap = _pad_cols(add2d, m_pad)
    kernel = functools.partial(_matmul_bias_add_act_kernel,
                               apply_act=apply_act)
    blk_bytes = 4 * (cout * cin + cin * tm + cout + 2 * cout * tm)
    out = pl.pallas_call(
        kernel,
        out_shape=jax.ShapeDtypeStruct((cout, m_pad), jnp.float32),
        grid=(m_pad // tm,),
        in_specs=[pl.BlockSpec((cout, cin), lambda j: (0, 0)),
                  pl.BlockSpec((cin, tm), lambda j: (0, j)),
                  pl.BlockSpec((cout, 1), lambda j: (0, 0)),
                  pl.BlockSpec((cout, tm), lambda j: (0, j))],
        out_specs=pl.BlockSpec((cout, tm), lambda j: (0, j)),
        compiler_params=pltpu.CompilerParams(
            dimension_semantics=("parallel",),
            vmem_limit_bytes=_vmem_limit(blk_bytes)),
        cost_estimate=pl.CostEstimate(
            flops=2 * cout * cin * m_pad + 2 * cout * m_pad,
            transcendentals=(cout * m_pad if apply_act else 0),
            bytes_accessed=4 * (cout * cin + cin * m_pad + cout
                                + 2 * cout * m_pad)),
    )(w, xp, b.reshape(cout, 1), ap)
    return out if m_pad == m else out[:, :m]


def pallas_spectral_mul(xs_g, w_bd, gb_target=8):
    """xs_g: (ngroups, B, G*2Cin) lane-dense grouped modes;
    w_bd: (ngroups, G*2Cin, G*2Cout) block-diagonal complex-as-real weights.
    Returns (ngroups, B, G*2Cout)."""
    ng, bsz, k = xs_g.shape
    n = w_bd.shape[2]
    gb = _choose_blk(ng, gb_target)
    return pl.pallas_call(
        _spectral_group_kernel,
        out_shape=jax.ShapeDtypeStruct((ng, bsz, n), jnp.float32),
        grid=(ng // gb,),
        in_specs=[pl.BlockSpec((gb, bsz, k), lambda g: (g, 0, 0)),
                  pl.BlockSpec((gb, k, n), lambda g: (g, 0, 0))],
        out_specs=pl.BlockSpec((gb, bsz, n), lambda g: (g, 0, 0)),
        compiler_params=pltpu.CompilerParams(
            dimension_semantics=("parallel",)),
        cost_estimate=pl.CostEstimate(
            flops=2 * ng * bsz * k * n,
            transcendentals=0,
            bytes_accessed=4 * (ng * bsz * k + ng * k * n + ng * bsz * n)),
    )(xs_g, w_bd)


# ---------------------------------------------------------------------------
# SpectralConv3d (FFT glue in JAX, lane-dense mode-mixing matmul in Pallas)
# ---------------------------------------------------------------------------
def spectral_conv3d_cf(h, w_bd, m1, m2, m3):
    """h: (Cin, B, X, Y, T) float32; w_bd: (ngroups, G*2Cin, G*2Cout).
    Returns (Cout, B, X, Y, T) float32."""
    Cin, B, X, Y, T = h.shape
    ng, gk, gn = w_bd.shape
    G = gk // (2 * Cin)
    Cout = gn // (2 * G)
    Tr = T // 2 + 1
    # Same implicit assumption as the PyTorch reference (non-overlapping
    # corner writes).
    assert 2 * m1 <= X and 2 * m2 <= Y and m3 <= Tr, \
        "retained modes exceed the available spectrum"

    x_ft = jnp.fft.rfftn(h, axes=(2, 3, 4))          # (Cin, B, X, Y, Tr) c64

    s1s = [slice(0, m1), slice(X - m1, X), slice(0, m1), slice(X - m1, X)]
    s2s = [slice(0, m2), slice(0, m2), slice(Y - m2, Y), slice(Y - m2, Y)]
    corners = jnp.stack([x_ft[:, :, a, b, 0:m3] for a, b in zip(s1s, s2s)],
                        axis=0)                      # (4, Cin, B, m1, m2, m3)

    nm = 4 * m1 * m2 * m3
    nm_pad = ng * G
    xm = jnp.transpose(corners, (0, 3, 4, 5, 2, 1)).reshape(nm, B, Cin)
    xs = jnp.concatenate([jnp.real(xm), jnp.imag(xm)], axis=-1)  # (nm,B,2Cin)
    if nm_pad != nm:
        xs = jnp.concatenate(
            [xs, jnp.zeros((nm_pad - nm, B, 2 * Cin), xs.dtype)], axis=0)
    # Pack G modes per group along the lane axis -> (ng, B, G*2Cin)
    xs_g = xs.reshape(ng, G, B, 2 * Cin).transpose(0, 2, 1, 3)
    xs_g = xs_g.reshape(ng, B, G * 2 * Cin)

    ys_g = pallas_spectral_mul(xs_g, w_bd)           # (ng, B, G*2Cout)
    ys = ys_g.reshape(ng, B, G, 2 * Cout).transpose(0, 2, 1, 3)
    ys = ys.reshape(nm_pad, B, 2 * Cout)[:nm]
    o = (ys[..., :Cout] + 1j * ys[..., Cout:]).astype(jnp.complex64)
    o = jnp.transpose(o.reshape(4, m1, m2, m3, B, Cout),
                      (0, 5, 4, 1, 2, 3))            # (4, Cout, B, m1, m2, m3)

    # Assemble out_ft by concatenation/padding of the 4 corner blocks
    # (no zeros-buffer + scatter chain).
    zy = jnp.zeros((Cout, B, m1, Y - 2 * m2, m3), jnp.complex64)
    row_lo = jnp.concatenate([o[0], zy, o[2]], axis=3)   # x in [0:m1]
    row_hi = jnp.concatenate([o[1], zy, o[3]], axis=3)   # x in [X-m1:X]
    zx = jnp.zeros((Cout, B, X - 2 * m1, Y, m3), jnp.complex64)
    out_lo_t = jnp.concatenate([row_lo, zx, row_hi], axis=2)  # (Cout,B,X,Y,m3)
    out_ft = jnp.pad(out_lo_t,
                     ((0, 0), (0, 0), (0, 0), (0, 0), (0, Tr - m3)))
    return jnp.fft.irfftn(out_ft, s=(X, Y, T), axes=(2, 3, 4))


# ---------------------------------------------------------------------------
# Full backbone forward
# ---------------------------------------------------------------------------
def fno3d_backbone_forward(x, params, *, modes1, modes2, modes3, layers,
                           pad_ratio):
    B, X, Y, T, in_dim = x.shape
    if max(pad_ratio) > 0:
        num_pad = [int(round(T * r)) for r in pad_ratio]
    else:
        num_pad = [0, 0]
    n_layers = len(layers) - 1

    # Channels-first internal layout: (C, B, X, Y, T) -> flattened (C, M).
    xt = jnp.transpose(x, (4, 0, 1, 2, 3)).reshape(in_dim, B * X * Y * T)
    h = pallas_linear_cf(params['fc0_w'], params['fc0_b'], xt)   # (C0, M)
    h = h.reshape(layers[0], B, X, Y, T)

    # padding along the t axis
    if max(num_pad) > 0:
        h = jnp.pad(h, ((0, 0), (0, 0), (0, 0), (0, 0),
                        (num_pad[0], num_pad[1])))
    Tp = h.shape[4]
    Mp = B * X * Y * Tp

    for i in range(n_layers):
        x1 = spectral_conv3d_cf(h, params['sp_w'][i],
                                modes1[i], modes2[i], modes3[i])
        h2 = pallas_conv1x1_add_act(params['w_w'][i], params['w_b'][i],
                                    h.reshape(layers[i], Mp),
                                    x1.reshape(layers[i + 1], Mp),
                                    apply_act=(i != n_layers - 1))
        h = h2.reshape(layers[i + 1], B, X, Y, Tp)

    if max(num_pad) > 0:
        end = Tp - num_pad[1] if num_pad[1] > 0 else Tp
        h = h[..., num_pad[0]:end]

    # back to PyTorch output layout (B, C, X, Y, T)
    return jnp.transpose(h, (1, 0, 2, 3, 4))


# ---------------------------------------------------------------------------
# Deterministic parameter init (shapes follow the PyTorch __init__).
# Spectral weights are packed ONCE into the grouped block-diagonal
# complex-as-real layout (ngroups, G*2Cin, G*2Cout) with G = 128 // (2*Cin)
# modes per group, so the Pallas mode-mix is fully 128-lane dense.
# ---------------------------------------------------------------------------
def _pack_spectral_weights(w_re, w_im):
    q, cin, cout, m1, m2, m3 = w_re.shape
    nm = q * m1 * m2 * m3
    wr = jnp.transpose(w_re, (0, 3, 4, 5, 1, 2)).reshape(nm, cin, cout)
    wi = jnp.transpose(w_im, (0, 3, 4, 5, 1, 2)).reshape(nm, cin, cout)
    top = jnp.concatenate([wr, wi], axis=-1)         # (nm, Cin, 2Cout)
    bot = jnp.concatenate([-wi, wr], axis=-1)
    w = jnp.concatenate([top, bot], axis=1)          # (nm, 2Cin, 2Cout)

    group = max(1, 128 // (2 * cin))
    nm_pad = _round_up(nm, group)
    if nm_pad != nm:
        w = jnp.concatenate(
            [w, jnp.zeros((nm_pad - nm, 2 * cin, 2 * cout), w.dtype)], axis=0)
    ngroups = nm_pad // group
    w = w.reshape(ngroups, group, 2 * cin, 2 * cout)
    eye = jnp.eye(group, dtype=w.dtype)
    # block-diagonal: (ngroups, group*2Cin, group*2Cout)
    w_bd = jnp.einsum('ij,gikn->gikjn', eye, w).reshape(
        ngroups, group * 2 * cin, group * 2 * cout)
    return w_bd


def init_params(key, in_dim, layers, modes1, modes2, modes3):
    n_layers = len(layers) - 1
    keys = jax.random.split(key, 2 + 4 * n_layers)
    ki = iter(keys)
    bound0 = 1.0 / math.sqrt(in_dim)
    params = {
        'fc0_w': jax.random.uniform(next(ki), (layers[0], in_dim),
                                    jnp.float32, -bound0, bound0),
        'fc0_b': jax.random.uniform(next(ki), (layers[0],),
                                    jnp.float32, -bound0, bound0),
        'sp_w': [], 'w_w': [], 'w_b': [],
    }
    for i in range(n_layers):
        cin, cout = layers[i], layers[i + 1]
        m1, m2, m3 = modes1[i], modes2[i], modes3[i]
        scale = 1.0 / (cin * cout)
        w_re = jax.random.uniform(next(ki), (4, cin, cout, m1, m2, m3),
                                  jnp.float32, 0.0, scale)
        w_im = jax.random.uniform(next(ki), (4, cin, cout, m1, m2, m3),
                                  jnp.float32, 0.0, scale)
        params['sp_w'].append(_pack_spectral_weights(w_re, w_im))
        bound = 1.0 / math.sqrt(cin)
        params['w_w'].append(jax.random.uniform(
            next(ki), (cout, cin), jnp.float32, -bound, bound))
        params['w_b'].append(jax.random.uniform(
            next(ki), (cout,), jnp.float32, -bound, bound))
    return params


# ---------------------------------------------------------------------------
if __name__ == "__main__":
    # Small config consistent with the module defaults.
    modes1 = [4, 4, 4]
    modes2 = [4, 4, 4]
    modes3 = [3, 3, 3]
    layers = [16, 16, 16, 16]      # width=16, 3 spectral layers
    in_dim = 4
    pad_ratio = [0.0, 0.0]
    B, X, Y, T = 2, 8, 8, 8

    key = jax.random.PRNGKey(0)
    k_in, k_par = jax.random.split(key)
    x = jax.random.normal(k_in, (B, X, Y, T, in_dim), dtype=jnp.float32)
    params = init_params(k_par, in_dim, layers, modes1, modes2, modes3)

    fwd = jax.jit(functools.partial(fno3d_backbone_forward,
                                    modes1=modes1, modes2=modes2,
                                    modes3=modes3, layers=layers,
                                    pad_ratio=pad_ratio))
    out = fwd(x, params)
    jax.block_until_ready(out)
    assert out.shape == (B, layers[-1], X, Y, T), out.shape
    assert out.dtype == jnp.float32
    print("KERNEL_OK")
</pallas_src>

<mosaic_0001>
module attributes {stable_mosaic.version = 11 : i64} {
  func.func @_matmul_bias_kernel(%arg0: i32, %arg1: memref<16x4xf32, #tpu.memory_space<vmem>>, %arg2: memref<4x128xf32, #tpu.memory_space<vmem>>, %arg3: memref<16x1xf32, #tpu.memory_space<vmem>>, %arg4: memref<16x128xf32, #tpu.memory_space<vmem>>) attributes {dimension_semantics = [#tpu.dimension_semantics<parallel>], iteration_bounds = array<i64: 8>, scalar_prefetch = 0 : i64, scratch_operands = 0 : i64, tpu.core_type = #tpu.core_type<tc>, window_params = [{pipeline_mode = #tpu.pipeline_mode<synchronous>, transform_indices = @transform_0, window_bounds = array<i64: 16, 4>}, {transform_indices = @transform_1, window_bounds = array<i64: 4, 128>}, {pipeline_mode = #tpu.pipeline_mode<synchronous>, transform_indices = @transform_2, window_bounds = array<i64: 16, 1>}, {transform_indices = @transform_3, window_bounds = array<i64: 16, 128>}]} {
    %c0 = arith.constant 0 : index
    %c0_0 = arith.constant 0 : index
    %0 = vector.load %arg1[%c0, %c0_0] : memref<16x4xf32, #tpu.memory_space<vmem>>, vector<16x4xf32>
    %c0_1 = arith.constant 0 : index
    %c0_2 = arith.constant 0 : index
    %1 = vector.load %arg2[%c0_1, %c0_2] : memref<4x128xf32, #tpu.memory_space<vmem>>, vector<4x128xf32>
    %cst = arith.constant dense<0.000000e+00> : vector<16x128xf32>
    %2 = tpu.matmul %0, %1, %cst {dimension_numbers = #tpu.dot_dimension_numbers<[1], [0], [0], [1], [0, 0, 1, 1], [], []>} : vector<16x4xf32>, vector<4x128xf32>, vector<16x128xf32> -> vector<16x128xf32>
    %c0_3 = arith.constant 0 : index
    %c0_4 = arith.constant 0 : index
    %3 = vector.load %arg3[%c0_3, %c0_4] : memref<16x1xf32, #tpu.memory_space<vmem>>, vector<16x1xf32>
    %4 = vector.broadcast %3 : vector<16x1xf32> to vector<16x128xf32>
    %5 = arith.addf %2, %4 : vector<16x128xf32>
    %c0_5 = arith.constant 0 : index
    %c0_6 = arith.constant 0 : index
    %6 = vector.load %arg4[%c0_5, %c0_6] : memref<16x128xf32, #tpu.memory_space<vmem>>, vector<16x128xf32>
    tpu.vector_store %arg4[%c0_5, %c0_6], %5 {strides = array<i32>} : memref<16x128xf32, #tpu.memory_space<vmem>>, vector<16x128xf32>,
    return
  }
  func.func @transform_0(%arg0: i32) -> (i32, i32) {
    %c0_i32 = arith.constant 0 : i32
    %c0_i32_0 = arith.constant 0 : i32
    %c0_i32_1 = arith.constant 0 : i32
    return %c0_i32, %c0_i32_0 : i32, i32
  }
  func.func @transform_1(%arg0: i32) -> (i32, i32) {
    %c0_i32 = arith.constant 0 : i32
    %c0_i32_0 = arith.constant 0 : i32
    return %c0_i32, %arg0 : i32, i32
  }
  func.func @transform_2(%arg0: i32) -> (i32, i32) {
    %c0_i32 = arith.constant 0 : i32
    %c0_i32_0 = arith.constant 0 : i32
    %c0_i32_1 = arith.constant 0 : i32
    return %c0_i32, %c0_i32_0 : i32, i32
  }
  func.func @transform_3(%arg0: i32) -> (i32, i32) {
    %c0_i32 = arith.constant 0 : i32
    %c0_i32_0 = arith.constant 0 : i32
    return %c0_i32, %arg0 : i32, i32
  }
}

module attributes {stable_mosaic.version = 11 : i64} {
  func.func @_spectral_group_kernel(%arg0: i32, %arg1: memref<8x2x128xf32, #tpu.memory_space<vmem>>, %arg2: memref<8x128x128xf32, #tpu.memory_space<vmem>>, %arg3: memref<8x2x128xf32, #tpu.memory_space<vmem>>) attributes {dimension_semantics = [#tpu.dimension_semantics<parallel>], iteration_bounds = array<i64: 6>, scalar_prefetch = 0 : i64, scratch_operands = 0 : i64, tpu.core_type = #tpu.core_type<tc>, window_params = [{transform_indices = @transform_0, window_bounds = array<i64: 8, 2, 128>}, {transform_indices = @transform_1, window_bounds = array<i64: 8, 128, 128>}, {transform_indices = @transform_2, window_bounds = array<i64: 8, 2, 128>}]} {
    %c0 = arith.constant 0 : index
    %c0_0 = arith.constant 0 : index
    %c0_1 = arith.constant 0 : index
    %0 = vector.load %arg1[%c0, %c0_0, %c0_1] : memref<8x2x128xf32, #tpu.memory_space<vmem>>, vector<8x2x128xf32>
    %c0_2 = arith.constant 0 : index
    %c0_3 = arith.constant 0 : index
    %c0_4 = arith.constant 0 : index
    %1 = vector.load %arg2[%c0_2, %c0_3, %c0_4] : memref<8x128x128xf32, #tpu.memory_space<vmem>>, vector<8x128x128xf32>
    %cst = arith.constant dense<0.000000e+00> : vector<8x2x128xf32>
    %2 = tpu.matmul %0, %1, %cst {dimension_numbers = #tpu.dot_dimension_numbers<[2], [1], [1], [2], [0, 0, 0, 1, 1, 2], [0], [0]>} : vector<8x2x128xf32>, vector<8x128x128xf32>, vector<8x2x128xf32> -> vector<8x2x128xf32>
    %c0_5 = arith.constant 0 : index
    %c0_6 = arith.constant 0 : index
    %c0_7 = arith.constant 0 : index
    %3 = vector.load %arg3[%c0_5, %c0_6, %c0_7] : memref<8x2x128xf32, #tpu.memory_space<vmem>>, vector<8x2x128xf32>
    tpu.vector_store %arg3[%c0_5, %c0_6, %c0_7], %2 {strides = array<i32>} : memref<8x2x128xf32, #tpu.memory_space<vmem>>, vector<8x2x128xf32>,
    return
  }
  func.func @transform_0(%arg0: i32) -> (i32, i32, i32) {
    %c0_i32 = arith.constant 0 : i32
    %c0_i32_0 = arith.constant 0 : i32
    %c0_i32_1 = arith.constant 0 : i32
    return %arg0, %c0_i32, %c0_i32_0 : i32, i32, i32
  }
  func.func @transform_1(%arg0: i32) -> (i32, i32, i32) {
    %c0_i32 = arith.constant 0 : i32
    %c0_i32_0 = arith.constant 0 : i32
    %c0_i32_1 = arith.constant 0 : i32
    return %arg0, %c0_i32, %c0_i32_0 : i32, i32, i32
  }
  func.func @transform_2(%arg0: i32) -> (i32, i32, i32) {
    %c0_i32 = arith.constant 0 : i32
    %c0_i32_0 = arith.constant 0 : i32
    %c0_i32_1 = arith.constant 0 : i32
    return %arg0, %c0_i32, %c0_i32_0 : i32, i32, i32
  }
}

module attributes {stable_mosaic.version = 11 : i64} {
  func.func @_matmul_bias_add_act_kernel(%arg0: i32, %arg1: memref<16x16xf32, #tpu.memory_space<vmem>>, %arg2: memref<16x128xf32, #tpu.memory_space<vmem>>, %arg3: memref<16x1xf32, #tpu.memory_space<vmem>>, %arg4: memref<16x128xf32, #tpu.memory_space<vmem>>, %arg5: memref<16x128xf32, #tpu.memory_space<vmem>>) attributes {dimension_semantics = [#tpu.dimension_semantics<parallel>], iteration_bounds = array<i64: 8>, scalar_prefetch = 0 : i64, scratch_operands = 0 : i64, tpu.core_type = #tpu.core_type<tc>, window_params = [{pipeline_mode = #tpu.pipeline_mode<synchronous>, transform_indices = @transform_0, window_bounds = array<i64: 16, 16>}, {transform_indices = @transform_1, window_bounds = array<i64: 16, 128>}, {pipeline_mode = #tpu.pipeline_mode<synchronous>, transform_indices = @transform_2, window_bounds = array<i64: 16, 1>}, {transform_indices = @transform_3, window_bounds = array<i64: 16, 128>}, {transform_indices = @transform_4, window_bounds = array<i64: 16, 128>}]} {
    %c0 = arith.constant 0 : index
    %c0_0 = arith.constant 0 : index
    %0 = vector.load %arg1[%c0, %c0_0] : memref<16x16xf32, #tpu.memory_space<vmem>>, vector<16x16xf32>
    %c0_1 = arith.constant 0 : index
    %c0_2 = arith.constant 0 : index
    %1 = vector.load %arg2[%c0_1, %c0_2] : memref<16x128xf32, #tpu.memory_space<vmem>>, vector<16x128xf32>
    %cst = arith.constant dense<0.000000e+00> : vector<16x128xf32>
    %2 = tpu.matmul %0, %1, %cst {dimension_numbers = #tpu.dot_dimension_numbers<[1], [0], [0], [1], [0, 0, 1, 1], [], []>} : vector<16x16xf32>, vector<16x128xf32>, vector<16x128xf32> -> vector<16x128xf32>
    %c0_3 = arith.constant 0 : index
    %c0_4 = arith.constant 0 : index
    %3 = vector.load %arg3[%c0_3, %c0_4] : memref<16x1xf32, #tpu.memory_space<vmem>>, vector<16x1xf32>
    %4 = vector.broadcast %3 : vector<16x1xf32> to vector<16x128xf32>
    %5 = arith.addf %2, %4 : vector<16x128xf32>
    %c0_5 = arith.constant 0 : index
    %c0_6 = arith.constant 0 : index
    %6 = vector.load %arg4[%c0_5, %c0_6] : memref<16x128xf32, #tpu.memory_space<vmem>>, vector<16x128xf32>
    %7 = arith.addf %5, %6 : vector<16x128xf32>
    %cst_7 = arith.constant 5.000000e-01 : f32
    %8 = vector.broadcast %cst_7 : f32 to vector<16x128xf32>
    %9 = arith.mulf %8, %7 : vector<16x128xf32>
    %cst_8 = arith.constant 4.471500e-02 : f32
    %10 = vector.broadcast %cst_8 : f32 to vector<16x128xf32>
    %11 = arith.mulf %10, %7 : vector<16x128xf32>
    %12 = arith.mulf %11, %7 : vector<16x128xf32>
    %13 = arith.mulf %12, %7 : vector<16x128xf32>
    %14 = arith.addf %7, %13 : vector<16x128xf32>
    %cst_9 = arith.constant 0.797884583 : f32
    %15 = vector.broadcast %cst_9 : f32 to vector<16x128xf32>
    %16 = arith.mulf %15, %14 : vector<16x128xf32>
    %17 = math.tanh %16 : vector<16x128xf32>
    %cst_10 = arith.constant 1.000000e+00 : f32
    %18 = vector.broadcast %cst_10 : f32 to vector<16x128xf32>
    %19 = arith.addf %18, %17 : vector<16x128xf32>
    %20 = arith.mulf %9, %19 : vector<16x128xf32>
    %c0_11 = arith.constant 0 : index
    %c0_12 = arith.constant 0 : index
    %21 = vector.load %arg5[%c0_11, %c0_12] : memref<16x128xf32, #tpu.memory_space<vmem>>, vector<16x128xf32>
    tpu.vector_store %arg5[%c0_11, %c0_12], %20 {strides = array<i32>} : memref<16x128xf32, #tpu.memory_space<vmem>>, vector<16x128xf32>,
    return
  }
  func.func @transform_0(%arg0: i32) -> (i32, i32) {
    %c0_i32 = arith.constant 0 : i32
    %c0_i32_0 = arith.constant 0 : i32
    %c0_i32_1 = arith.constant 0 : i32
    return %c0_i32, %c0_i32_0 : i32, i32
  }
  func.func @transform_1(%arg0: i32) -> (i32, i32) {
    %c0_i32 = arith.constant 0 : i32
    %c0_i32_0 = arith.constant 0 : i32
    return %c0_i32, %arg0 : i32, i32
  }
  func.func @transform_2(%arg0: i32) -> (i32, i32) {
    %c0_i32 = arith.constant 0 : i32
    %c0_i32_0 = arith.constant 0 : i32
    %c0_i32_1 = arith.constant 0 : i32
    return %c0_i32, %c0_i32_0 : i32, i32
  }
  func.func @transform_3(%arg0: i32) -> (i32, i32) {
    %c0_i32 = arith.constant 0 : i32
    %c0_i32_0 = arith.constant 0 : i32
    return %c0_i32, %arg0 : i32, i32
  }
  func.func @transform_4(%arg0: i32) -> (i32, i32) {
    %c0_i32 = arith.constant 0 : i32
    %c0_i32_0 = arith.constant 0 : i32
    return %c0_i32, %arg0 : i32, i32
  }
}

module attributes {stable_mosaic.version = 11 : i64} {
  func.func @_matmul_bias_add_act_kernel(%arg0: i32, %arg1: memref<16x16xf32, #tpu.memory_space<vmem>>, %arg2: memref<16x128xf32, #tpu.memory_space<vmem>>, %arg3: memref<16x1xf32, #tpu.memory_space<vmem>>, %arg4: memref<16x128xf32, #tpu.memory_space<vmem>>, %arg5: memref<16x128xf32, #tpu.memory_space<vmem>>) attributes {dimension_semantics = [#tpu.dimension_semantics<parallel>], iteration_bounds = array<i64: 8>, scalar_prefetch = 0 : i64, scratch_operands = 0 : i64, tpu.core_type = #tpu.core_type<tc>, window_params = [{pipeline_mode = #tpu.pipeline_mode<synchronous>, transform_indices = @transform_0, window_bounds = array<i64: 16, 16>}, {transform_indices = @transform_1, window_bounds = array<i64: 16, 128>}, {pipeline_mode = #tpu.pipeline_mode<synchronous>, transform_indices = @transform_2, window_bounds = array<i64: 16, 1>}, {transform_indices = @transform_3, window_bounds = array<i64: 16, 128>}, {transform_indices = @transform_4, window_bounds = array<i64: 16, 128>}]} {
    %c0 = arith.constant 0 : index
    %c0_0 = arith.constant 0 : index
    %0 = vector.load %arg1[%c0, %c0_0] : memref<16x16xf32, #tpu.memory_space<vmem>>, vector<16x16xf32>
    %c0_1 = arith.constant 0 : index
    %c0_2 = arith.constant 0 : index
    %1 = vector.load %arg2[%c0_1, %c0_2] : memref<16x128xf32, #tpu.memory_space<vmem>>, vector<16x128xf32>
    %cst = arith.constant dense<0.000000e+00> : vector<16x128xf32>
    %2 = tpu.matmul %0, %1, %cst {dimension_numbers = #tpu.dot_dimension_numbers<[1], [0], [0], [1], [0, 0, 1, 1], [], []>} : vector<16x16xf32>, vector<16x128xf32>, vector<16x128xf32> -> vector<16x128xf32>
    %c0_3 = arith.constant 0 : index
    %c0_4 = arith.constant 0 : index
    %3 = vector.load %arg3[%c0_3, %c0_4] : memref<16x1xf32, #tpu.memory_space<vmem>>, vector<16x1xf32>
    %4 = vector.broadcast %3 : vector<16x1xf32> to vector<16x128xf32>
    %5 = arith.addf %2, %4 : vector<16x128xf32>
    %c0_5 = arith.constant 0 : index
    %c0_6 = arith.constant 0 : index
    %6 = vector.load %arg4[%c0_5, %c0_6] : memref<16x128xf32, #tpu.memory_space<vmem>>, vector<16x128xf32>
    %7 = arith.addf %5, %6 : vector<16x128xf32>
    %c0_7 = arith.constant 0 : index
    %c0_8 = arith.constant 0 : index
    %8 = vector.load %arg5[%c0_7, %c0_8] : memref<16x128xf32, #tpu.memory_space<vmem>>, vector<16x128xf32>
    tpu.vector_store %arg5[%c0_7, %c0_8], %7 {strides = array<i32>} : memref<16x128xf32, #tpu.memory_space<vmem>>, vector<16x128xf32>,
    return
  }
  func.func @transform_0(%arg0: i32) -> (i32, i32) {
    %c0_i32 = arith.constant 0 : i32
    %c0_i32_0 = arith.constant 0 : i32
    %c0_i32_1 = arith.constant 0 : i32
    return %c0_i32, %c0_i32_0 : i32, i32
  }
  func.func @transform_1(%arg0: i32) -> (i32, i32) {
    %c0_i32 = arith.constant 0 : i32
    %c0_i32_0 = arith.constant 0 : i32
    return %c0_i32, %arg0 : i32, i32
  }
  func.func @transform_2(%arg0: i32) -> (i32, i32) {
    %c0_i32 = arith.constant 0 : i32
    %c0_i32_0 = arith.constant 0 : i32
    %c0_i32_1 = arith.constant 0 : i32
    return %c0_i32, %c0_i32_0 : i32, i32
  }
  func.func @transform_3(%arg0: i32) -> (i32, i32) {
    %c0_i32 = arith.constant 0 : i32
    %c0_i32_0 = arith.constant 0 : i32
    return %c0_i32, %arg0 : i32, i32
  }
  func.func @transform_4(%arg0: i32) -> (i32, i32) {
    %c0_i32 = arith.constant 0 : i32
    %c0_i32_0 = arith.constant 0 : i32
    return %c0_i32, %arg0 : i32, i32
  }
}

</mosaic_0001>

<llo_original>
// kernel: fno3d_backbone_forward.7
$region0: #{fno3d_backbone_forward.7}
  #allocation0 [shape = 'u32[]', space=smem, size = 0x4, offset = 0x4, fixed_abs, tag = 'smem constant byte address 0x4 - core index']
  #allocation1 [shape = 'u32[72,128]{1,0:T(1,128)}', space=vmem, size = 0x9000, scoped, tag = 'internal scratch']
  %s0 = inlined_call_operand.vmem [shape: f32[16,4], index: 0, kind: input, shape index: {}]
  %s1 = inlined_call_operand.vmem [shape: f32[4,1024], index: 1, kind: input, shape index: {}]
  %s2 = inlined_call_operand.vmem [shape: f32[16,1], index: 2, kind: input, shape index: {}]
  %s3 = inlined_call_operand.vmem [shape: f32[16,1024], index: 3, kind: output, shape index: {}]
  %s4 = sld [smem:[#allocation0]]
  $region79: #{fno3d_backbone_forward.7} parent=0
    _
  %s6 = ssub.s32 1, %s4
  %s7 = scalar_select 0, %s6, %s4
  $region1: #{fno3d_backbone_forward.7} parent=0
    #allocation2 [shape = 'u8[16384]{0}', space=vmem, size = 0x4000, scoped, tag = 'output window, operand 0']
    loop: start=0, step=1, limit=10
    $region2: #{fno3d_backbone_forward.7} parent=1 // loop_pre_header
      _
    $region3: #{fno3d_backbone_forward.7} parent=1 // loop_header
      %s9 = sphi 0, %s13
      %p10 = scmp.ge.s32.totalorder %s9, 10
      %s17 = sphi 0, %s17
      %s19 = sphi 0, %s17
      %s20 = sphi 0, %s19
      %s34 = sphi 0, %s20
      %s40 = sphi 0, %s42
      %s43 = sphi 0, %s40
      %s44 = sphi 0, %s43
      %s60 = sphi 0, %s44
      %s64 = sphi 0, %s64
      %s66 = sphi 0, %s64
      %s67 = sphi 0, %s66
      %s81 = sphi 0, %s67
      %s87 = sphi 0, %s89
      %s90 = sphi 0, %s87
      %s91 = sphi 0, %s90
      %s107 = sphi 0, %s91
    $region4: #{fno3d_backbone_forward.7} parent=1 // loop_header_branch
      %12 = sbr.rel (%p10) target = $region8
    $region5: #{fno3d_backbone_forward.7} parent=1 // loop_body
      %s14 = ssub.s32 %s9, 1
      %s15 = ssub.s32 %s9, 2
      %s16 = sadd.s32 %s9, 1
      %s18 = sadd.s32 %s17, 1
      %p21 = scmp.eq.s32.totalorder %s9, 7
      %p22 = scmp.ne.s32.totalorder %s17, %s19
      %p23 = scmp.eq.s32.totalorder %s9, 0
      %p24 = por %p22, %p23
      %p25 = scmp.ne.s32.totalorder %s17, %s19
      %p26 = scmp.eq.s32.totalorder %s14, 7
      %p27 = por %p25, %p26
      %p28 = scmp.ne.s32.totalorder %s19, %s20
      %p29 = scmp.eq.s32.totalorder %s14, 0
      %p30 = por %p28, %p29
      %p31 = scmp.ne.s32.totalorder %s19, %s20
      %p32 = scmp.eq.s32.totalorder %s15, 7
      %p33 = por %p31, %p32
      %p35 = scmp.ne.s32.totalorder %s20, %s34
      %p36 = scmp.eq.s32.totalorder %s15, 0
      %p37 = por %p35, %p36
      %s38 = ssub.s32 %s9, %s16
      %p39 = scmp.eq.s32.totalorder %s38, 0
      %s41 = sadd.s32 %s40, 1
      %s42 = scalar_select %p39, %s40, %s41
      %p45 = pneg %p39
      %p46 = scmp.eq.s32.totalorder %s9, 7
      %p47 = por %p45, %p46
      %p48 = scmp.ne.s32.totalorder %s40, %s43
      %p49 = scmp.eq.s32.totalorder %s9, 0
      %p50 = por %p48, %p49
      %p51 = scmp.ne.s32.totalorder %s40, %s43
      %p52 = scmp.eq.s32.totalorder %s14, 7
      %p53 = por %p51, %p52
      %p54 = scmp.ne.s32.totalorder %s43, %s44
      %p55 = scmp.eq.s32.totalorder %s14, 0
      %p56 = por %p54, %p55
      %p57 = scmp.ne.s32.totalorder %s43, %s44
      %p58 = scmp.eq.s32.totalorder %s15, 7
      %p59 = por %p57, %p58
      %p61 = scmp.ne.s32.totalorder %s44, %s60
      %p62 = scmp.eq.s32.totalorder %s15, 0
      %p63 = por %p61, %p62
      %s65 = sadd.s32 %s64, 1
      %p68 = scmp.eq.s32.totalorder %s9, 7
      %p69 = scmp.ne.s32.totalorder %s64, %s66
      %p70 = scmp.eq.s32.totalorder %s9, 0
      %p71 = por %p69, %p70
      %p72 = scmp.ne.s32.totalorder %s64, %s66
      %p73 = scmp.eq.s32.totalorder %s14, 7
      %p74 = por %p72, %p73
      %p75 = scmp.ne.s32.totalorder %s66, %s67
      %p76 = scmp.eq.s32.totalorder %s14, 0
      %p77 = por %p75, %p76
      %p78 = scmp.ne.s32.totalorder %s66, %s67
      %p79 = scmp.eq.s32.totalorder %s15, 7
      %p80 = por %p78, %p79
      %p82 = scmp.ne.s32.totalorder %s67, %s81
      %p83 = scmp.eq.s32.totalorder %s15, 0
      %p84 = por %p82, %p83
      %s85 = ssub.s32 %s9, %s16
      %p86 = scmp.eq.s32.totalorder %s85, 0
      %s88 = sadd.s32 %s87, 1
      %s89 = scalar_select %p86, %s87, %s88
      %p92 = pneg %p86
      %p93 = scmp.eq.s32.totalorder %s9, 7
      %p94 = por %p92, %p93
      %p95 = scmp.ne.s32.totalorder %s87, %s90
      %p96 = scmp.eq.s32.totalorder %s9, 0
      %p97 = por %p95, %p96
      %p98 = scmp.ne.s32.totalorder %s87, %s90
      %p99 = scmp.eq.s32.totalorder %s14, 7
      %p100 = por %p98, %p99
      %p101 = scmp.ne.s32.totalorder %s90, %s91
      %p102 = scmp.eq.s32.totalorder %s14, 0
      %p103 = por %p101, %p102
      %p104 = scmp.ne.s32.totalorder %s90, %s91
      %p105 = scmp.eq.s32.totalorder %s15, 7
      %p106 = por %p104, %p105
      %p108 = scmp.ne.s32.totalorder %s91, %s107
      %p109 = scmp.eq.s32.totalorder %s15, 0
      %p110 = por %p108, %p109
      %p111 = scmp.le.s32.totalorder 1, %s9
      %p112 = scmp.lt.s32.totalorder %s9, 9
      %p113 = pnand %p111, %p112
      %p114 = pneg %p113
      // Predicated region
      $region9: #{fno3d_backbone_forward.7} parent=5 // pred_check
        _
      $region10: #{fno3d_backbone_forward.7} parent=5 // pred_check_branch
        %116 = sbr.rel (%p113) target = $region12
      $region11: #{fno3d_backbone_forward.7} parent=5 // pred_region
        %s117 = ssub.s32 %s9, 1
        // Predicated region
        $region13: #{fno3d_backbone_forward.7} parent=11 // pred_check
          %p118 = pneg %p30
        $region14: #{fno3d_backbone_forward.7} parent=11 // pred_check_branch
          %120 = sbr.rel (%p118) target = $region16
        $region15: #{fno3d_backbone_forward.7} parent=11 // pred_region
          _
        $region16: #{fno3d_backbone_forward.7} parent=11 // pred_fallthru
          _
        // Predicated region
        $region17: #{fno3d_backbone_forward.7} parent=11 // pred_check
          %p121 = pneg %p77
        $region18: #{fno3d_backbone_forward.7} parent=11 // pred_check_branch
          %123 = sbr.rel (%p121) target = $region20
        $region19: #{fno3d_backbone_forward.7} parent=11 // pred_region
          _
        $region20: #{fno3d_backbone_forward.7} parent=11 // pred_fallthru
          _
      $region12: #{fno3d_backbone_forward.7} parent=5 // pred_fallthru
        _
      %p124 = scmp.lt.s32.totalorder %s9, 8
      // Predicated region
      $region21: #{fno3d_backbone_forward.7} parent=5 // pred_check
        %p125 = pneg %p124
      $region22: #{fno3d_backbone_forward.7} parent=5 // pred_check_branch
        %127 = sbr.rel (%p125) target = $region24
      $region23: #{fno3d_backbone_forward.7} parent=5 // pred_region
        // Predicated region
        $region25: #{fno3d_backbone_forward.7} parent=23 // pred_check
          %p128 = pneg %p50
        $region26: #{fno3d_backbone_forward.7} parent=23 // pred_check_branch
          %130 = sbr.rel (%p128) target = $region28
        $region27: #{fno3d_backbone_forward.7} parent=23 // pred_region
          %p131 = scmp.lt.s32.totalorder %s9, 7
          %s132 = scalar_select %p131, %s9, 7
          %s133 = smul.addr %s132, 4
          %s134 = scalar_lea.vmem %s1, %s133
        $region28: #{fno3d_backbone_forward.7} parent=23 // pred_fallthru
          _
      $region24: #{fno3d_backbone_forward.7} parent=5 // pred_fallthru
        _
      %p135 = scmp.le.s32.totalorder 1, %s9
      %p136 = scmp.lt.s32.totalorder %s9, 9
      %p137 = pnand %p135, %p136
      %p138 = pneg %p137
      // Predicated region
      $region29: #{fno3d_backbone_forward.7} parent=5 // pred_check
        _
      $region30: #{fno3d_backbone_forward.7} parent=5 // pred_check_branch
        %140 = sbr.rel (%p137) target = $region32
      $region31: #{fno3d_backbone_forward.7} parent=5 // pred_region
        %s141 = ssub.s32 %s9, 1
        %p142 = pneg %p30
        %p143 = pneg %p27
        %p144 = scmp.lt.s32.totalorder %s14, 7
        %s145 = scalar_select %p144, %s14, 7
        %s146 = smul.addr %s145, 4
        %s147 = scalar_lea.vmem %s1, %s146
        %p148 = pneg %p56
        %p149 = pneg %p53
        %p150 = pneg %p77
        %p151 = pneg %p74
        %p152 = pneg %p103
        %p153 = pneg %p100
        %s154 = sand.u32 %s90, 1
        %s155 = sand.u32 %s90, 1
        %s156 = smul.addr %s155, 16
        %s157 = scalar_lea.vmem [#allocation2], %s156
        %p158 = scmp.lt.s32.totalorder %s14, 7
        %s159 = scalar_select %p158, %s14, 7
        %s160 = smul.addr %s159, 4
        %s161 = scalar_lea.vmem %s1, %s160
        %v162 = vld [vmem:[%s0] sm:$0xff]
        %v163 = vld [vmem:[%s0 + $0x8] sm:$0xff]
        %v164 = vld [vmem:[%s161] sm:$0xf]
        %v165 = vld [vmem:[%s2] sm:$0xff]
        %v166 = vld [vmem:[%s2 + $0x8] sm:$0xff]
        %168 = vset.pattern.permute.xlu0 0
        %169 = vperm.xlu0 %168, %v165
        %v170 = vpop.permute.xlu0 %169
        %173 = vset.pattern.permute.xlu0 0
        %174 = vperm.xlu0 %173, %v166
        %v175 = vpop.permute.xlu0 %174
        %vm177 = vcmask 31744
        %v179 = vsel %vm177, %v162, 0
        %v182 = vsel %vm177, %v163, 0
        %vm184 = vcmask 1043456
        %v186 = vsel %vm184, %v164, 0
        %188 = vmatpush.msra.mxu0 0.0
        %189 = vmatpush.msra.mxu0 0.0
        %190 = vmatpush.msra.mxu0 0.0
        %191 = vmatpush.msra.mxu0 0.0
        %192 = vmatpush.msra.mxu0 0.0
        %193 = vmatpush.msra.mxu0 0.0
        %194 = vmatpush.msra.mxu0 0.0
        %195 = vmatpush.msra.mxu0 0.0
        %196 = vmatpush.msra.mxu0 0.0
        %197 = vmatpush.msra.mxu0 0.0
        %198 = vmatpush.msra.mxu0 0.0
        %199 = vmatpush.msra.mxu0 0.0
        %200 = vmatpush.msra.mxu0 0.0
        %201 = vmatpush.msra.mxu0 0.0
        %202 = vmatpush.msra.mxu0 0.0
        %203 = vmatpush.msra.mxu0 %v186
        %204 = vmatmul.f32.gmra.mxu0 %v179
        %v205 = vpop.f32.mrf.mxu0
        %v206 = vadd.f32 %v170, %v205
        %207 = vmatmul.f32.gmra.mxu0 %v182
        %v208 = vpop.f32.mrf.mxu0
        %v209 = vadd.f32 %v175, %v208
        %210 = vdwg.mxu0
        %211 = vst [vmem:[%s157] sm:$0xff] %v206
        %212 = vst [vmem:[%s157 + $0x8] sm:$0xff] %v209
        %s213 = sand.u32 %s90, 1
        %s214 = sand.u32 %s90, 1
        %s215 = smul.addr %s214, 16
        %s216 = scalar_lea.vmem [#allocation2], %s215
        // Predicated region
        $region33: #{fno3d_backbone_forward.7} parent=31 // pred_check
          %p217 = pneg %p100
        $region34: #{fno3d_backbone_forward.7} parent=31 // pred_check_branch
          %219 = sbr.rel (%p217) target = $region36
        $region35: #{fno3d_backbone_forward.7} parent=31 // pred_region
          %s220 = smul.addr %s14, 8
          %s221 = scalar_lea.vmem %s3, %s220
          // Predicated region
          $region37: #{fno3d_backbone_forward.7} parent=35 // pred_check
            _
          $region38: #{fno3d_backbone_forward.7} parent=35 // pred_check_branch
            %223 = sbr.rel (0) target = $region40
          $region39: #{fno3d_backbone_forward.7} parent=35 // pred_region
            // Predicated region
            $region41: #{fno3d_backbone_forward.7} parent=39 // pred_check
              _
            $region42: #{fno3d_backbone_forward.7} parent=39 // pred_check_branch
              %225 = sbr.rel (0) target = $region44
            $region43: #{fno3d_backbone_forward.7} parent=39 // pred_region
              // Predicated region
              $region56: #{fno3d_backbone_forward.7} parent=43 // pred_check
                _
              $region57: #{fno3d_backbone_forward.7} parent=43 // pred_check_branch
                %243 = sbr.rel (0) target = $region59
              $region58: #{fno3d_backbone_forward.7} parent=43 // pred_region
                loop: start=0, step=1, limit=1
                $region60: #{fno3d_backbone_forward.7} parent=58 // loop_pre_header
                  _
                $region61: #{fno3d_backbone_forward.7} parent=58 // loop_header
                  %s245 = sphi 0, %s249
                  %p246 = scmp.ge.s32.totalorder %s245, 1
                  %s250 = sphi %s216, %s216
                  %s251 = sphi %s221, %s221
                $region62: #{fno3d_backbone_forward.7} parent=58 // loop_header_branch
                  %248 = sbr.rel (%p246) target = $region66
                $region63: #{fno3d_backbone_forward.7} parent=58 // loop_body
                  %v252 = vld [vmem:[%s250] sm:$0xff]
                  %253 = vst [vmem:[%s251] sm:$0xff] %v252
                  %v254 = vld [vmem:[%s250 + $0x8] sm:$0xff]
                  %255 = vst [vmem:[%s251 + $0x40] sm:$0xff] %v254
                $region64: #{fno3d_backbone_forward.7} parent=58 // loop_footer
                  %s249 = sadd.s32 1, %s245
                $region65: #{fno3d_backbone_forward.7} parent=58 // loop_footer_branch
                  %244 = sbr.rel target = $region61
                $region66: #{fno3d_backbone_forward.7} parent=58 // loop_exit
                  _
              $region59: #{fno3d_backbone_forward.7} parent=43 // pred_fallthru
                _
              // Predicated region
              $region67: #{fno3d_backbone_forward.7} parent=43 // pred_check
                _
              $region68: #{fno3d_backbone_forward.7} parent=43 // pred_check_branch
                %257 = sbr.rel target = $region70
              $region69: #{fno3d_backbone_forward.7} parent=43 // pred_region
                _
              $region70: #{fno3d_backbone_forward.7} parent=43 // pred_fallthru
                _
            $region44: #{fno3d_backbone_forward.7} parent=39 // pred_fallthru
              _
            // Predicated region
            $region45: #{fno3d_backbone_forward.7} parent=39 // pred_check
              _
            $region46: #{fno3d_backbone_forward.7} parent=39 // pred_check_branch
              %227 = sbr.rel target = $region48
            $region47: #{fno3d_backbone_forward.7} parent=39 // pred_region
              %s229 = ssub.s32 256, 1
              loop: start=0, step=1, limit=1
              $region49: #{fno3d_backbone_forward.7} parent=47 // loop_pre_header
                _
              $region50: #{fno3d_backbone_forward.7} parent=47 // loop_header
                %s231 = sphi 0, %s235
                %p232 = scmp.ge.s32.totalorder %s231, 1
                %s236 = sphi %s216, %s216
                %s237 = sphi %s221, %s221
              $region51: #{fno3d_backbone_forward.7} parent=47 // loop_header_branch
                %234 = sbr.rel (%p232) target = $region55
              $region52: #{fno3d_backbone_forward.7} parent=47 // loop_body
                %v238 = vld [vmem:[%s236] sm:%s229]
                %239 = vst [vmem:[%s237] sm:%s229] %v238
                %v240 = vld [vmem:[%s236 + $0x8] sm:%s229]
                %241 = vst [vmem:[%s237 + $0x40] sm:%s229] %v240
              $region53: #{fno3d_backbone_forward.7} parent=47 // loop_footer
                %s235 = sadd.s32 1, %s231
              $region54: #{fno3d_backbone_forward.7} parent=47 // loop_footer_branch
                %230 = sbr.rel target = $region50
              $region55: #{fno3d_backbone_forward.7} parent=47 // loop_exit
                _
            $region48: #{fno3d_backbone_forward.7} parent=39 // pred_fallthru
              _
          $region40: #{fno3d_backbone_forward.7} parent=35 // pred_fallthru
            _
          %258 = vnop
        $region36: #{fno3d_backbone_forward.7} parent=31 // pred_fallthru
          _
      $region32: #{fno3d_backbone_forward.7} parent=5 // pred_fallthru
        _
      %p259 = scmp.le.s32.totalorder 2, %s9
      // Predicated region
      $region71: #{fno3d_backbone_forward.7} parent=5 // pred_check
        %p260 = pneg %p259
      $region72: #{fno3d_backbone_forward.7} parent=5 // pred_check_branch
        %262 = sbr.rel (%p260) target = $region74
      $region73: #{fno3d_backbone_forward.7} parent=5 // pred_region
        %s263 = ssub.s32 %s9, 2
        // Predicated region
        $region75: #{fno3d_backbone_forward.7} parent=73 // pred_check
          %p264 = pneg %p106
        $region76: #{fno3d_backbone_forward.7} parent=73 // pred_check_branch
          %266 = sbr.rel (%p264) target = $region78
        $region77: #{fno3d_backbone_forward.7} parent=73 // pred_region
          %s267 = sand.u32 %s91, 1
          %s268 = sand.u32 %s91, 1
          %s269 = smul.addr %s268, 16
          %s270 = scalar_lea.vmem [#allocation2], %s269
        $region78: #{fno3d_backbone_forward.7} parent=73 // pred_fallthru
          _
      $region74: #{fno3d_backbone_forward.7} parent=5 // pred_fallthru
        _
    $region6: #{fno3d_backbone_forward.7} parent=1 // loop_footer
      %s13 = sadd.s32 1, %s9
    $region7: #{fno3d_backbone_forward.7} parent=1 // loop_footer_branch
      %8 = sbr.rel target = $region3
    $region8: #{fno3d_backbone_forward.7} parent=1 // loop_exit
      _

// kernel: fno3d_backbone_forward.8
$region0: #{fno3d_backbone_forward.8}
  #allocation0 [shape = 'u32[]', space=smem, size = 0x4, offset = 0x4, fixed_abs, tag = 'smem constant byte address 0x4 - core index']
  #allocation1 [shape = 'u32[72,128]{1,0:T(1,128)}', space=vmem, size = 0x9000, scoped, tag = 'internal scratch']
  %s0 = inlined_call_operand.vmem [shape: f32[48,2,128], index: 0, kind: input, shape index: {}]
  %s1 = inlined_call_operand.vmem [shape: f32[48,128,128], index: 1, kind: input, shape index: {}]
  %s2 = inlined_call_operand.vmem [shape: f32[48,2,128], index: 2, kind: output, shape index: {}]
  %s3 = sld [smem:[#allocation0]]
  $region41: #{fno3d_backbone_forward.8} parent=0
    _
  %s5 = ssub.s32 1, %s3
  %s6 = scalar_select 0, %s5, %s3
  loop: start=0, step=1, limit=8
  $region2: #{fno3d_backbone_forward.8} parent=0 // loop_pre_header
    _
  $region3: #{fno3d_backbone_forward.8} parent=0 // loop_header
    %s8 = sphi 0, %s12
    %p9 = scmp.ge.s32.totalorder %s8, 8
    %s18 = sphi 0, %s20
    %s21 = sphi 0, %s18
    %s22 = sphi 0, %s21
    %s38 = sphi 0, %s22
    %s44 = sphi 0, %s46
    %s47 = sphi 0, %s44
    %s48 = sphi 0, %s47
    %s64 = sphi 0, %s48
    %s70 = sphi 0, %s72
    %s73 = sphi 0, %s70
    %s74 = sphi 0, %s73
    %s90 = sphi 0, %s74
  $region4: #{fno3d_backbone_forward.8} parent=0 // loop_header_branch
    %11 = sbr.rel (%p9) target = $region8
  $region5: #{fno3d_backbone_forward.8} parent=0 // loop_body
    %s13 = ssub.s32 %s8, 1
    %s14 = ssub.s32 %s8, 2
    %s15 = sadd.s32 %s8, 1
    %s16 = ssub.s32 %s8, %s15
    %p17 = scmp.eq.s32.totalorder %s16, 0
    %s19 = sadd.s32 %s18, 1
    %s20 = scalar_select %p17, %s18, %s19
    %p23 = pneg %p17
    %p24 = scmp.eq.s32.totalorder %s8, 5
    %p25 = por %p23, %p24
    %p26 = scmp.ne.s32.totalorder %s18, %s21
    %p27 = scmp.eq.s32.totalorder %s8, 0
    %p28 = por %p26, %p27
    %p29 = scmp.ne.s32.totalorder %s18, %s21
    %p30 = scmp.eq.s32.totalorder %s13, 5
    %p31 = por %p29, %p30
    %p32 = scmp.ne.s32.totalorder %s21, %s22
    %p33 = scmp.eq.s32.totalorder %s13, 0
    %p34 = por %p32, %p33
    %p35 = scmp.ne.s32.totalorder %s21, %s22
    %p36 = scmp.eq.s32.totalorder %s14, 5
    %p37 = por %p35, %p36
    %p39 = scmp.ne.s32.totalorder %s22, %s38
    %p40 = scmp.eq.s32.totalorder %s14, 0
    %p41 = por %p39, %p40
    %s42 = ssub.s32 %s8, %s15
    %p43 = scmp.eq.s32.totalorder %s42, 0
    %s45 = sadd.s32 %s44, 1
    %s46 = scalar_select %p43, %s44, %s45
    %p49 = pneg %p43
    %p50 = scmp.eq.s32.totalorder %s8, 5
    %p51 = por %p49, %p50
    %p52 = scmp.ne.s32.totalorder %s44, %s47
    %p53 = scmp.eq.s32.totalorder %s8, 0
    %p54 = por %p52, %p53
    %p55 = scmp.ne.s32.totalorder %s44, %s47
    %p56 = scmp.eq.s32.totalorder %s13, 5
    %p57 = por %p55, %p56
    %p58 = scmp.ne.s32.totalorder %s47, %s48
    %p59 = scmp.eq.s32.totalorder %s13, 0
    %p60 = por %p58, %p59
    %p61 = scmp.ne.s32.totalorder %s47, %s48
    %p62 = scmp.eq.s32.totalorder %s14, 5
    %p63 = por %p61, %p62
    %p65 = scmp.ne.s32.totalorder %s48, %s64
    %p66 = scmp.eq.s32.totalorder %s14, 0
    %p67 = por %p65, %p66
    %s68 = ssub.s32 %s8, %s15
    %p69 = scmp.eq.s32.totalorder %s68, 0
    %s71 = sadd.s32 %s70, 1
    %s72 = scalar_select %p69, %s70, %s71
    %p75 = pneg %p69
    %p76 = scmp.eq.s32.totalorder %s8, 5
    %p77 = por %p75, %p76
    %p78 = scmp.ne.s32.totalorder %s70, %s73
    %p79 = scmp.eq.s32.totalorder %s8, 0
    %p80 = por %p78, %p79
    %p81 = scmp.ne.s32.totalorder %s70, %s73
    %p82 = scmp.eq.s32.totalorder %s13, 5
    %p83 = por %p81, %p82
    %p84 = scmp.ne.s32.totalorder %s73, %s74
    %p85 = scmp.eq.s32.totalorder %s13, 0
    %p86 = por %p84, %p85
    %p87 = scmp.ne.s32.totalorder %s73, %s74
    %p88 = scmp.eq.s32.totalorder %s14, 5
    %p89 = por %p87, %p88
    %p91 = scmp.ne.s32.totalorder %s74, %s90
    %p92 = scmp.eq.s32.totalorder %s14, 0
    %p93 = por %p91, %p92
    %p94 = scmp.le.s32.totalorder 1, %s8
    %p95 = scmp.lt.s32.totalorder %s8, 7
    %p96 = pnand %p94, %p95
    %p97 = pneg %p96
    // Predicated region
    $region9: #{fno3d_backbone_forward.8} parent=5 // pred_check
      _
    $region10: #{fno3d_backbone_forward.8} parent=5 // pred_check_branch
      %99 = sbr.rel (%p96) target = $region12
    $region11: #{fno3d_backbone_forward.8} parent=5 // pred_region
      %s100 = ssub.s32 %s8, 1
    $region12: #{fno3d_backbone_forward.8} parent=5 // pred_fallthru
      _
    %p101 = scmp.lt.s32.totalorder %s8, 6
    // Predicated region
    $region13: #{fno3d_backbone_forward.8} parent=5 // pred_check
      %p102 = pneg %p101
    $region14: #{fno3d_backbone_forward.8} parent=5 // pred_check_branch
      %104 = sbr.rel (%p102) target = $region16
    $region15: #{fno3d_backbone_forward.8} parent=5 // pred_region
      // Predicated region
      $region17: #{fno3d_backbone_forward.8} parent=15 // pred_check
        %p105 = pneg %p28
      $region18: #{fno3d_backbone_forward.8} parent=15 // pred_check_branch
        %107 = sbr.rel (%p105) target = $region20
      $region19: #{fno3d_backbone_forward.8} parent=15 // pred_region
        %s108 = smul.u32 8, %s8
        %p109 = scmp.lt.s32.totalorder %s108, 47
        %s110 = scalar_select %p109, %s108, 47
        %s111 = smul.addr %s110, 2
        %s112 = scalar_lea.vmem %s0, %s111
        %s113 = smul.u32 8, %s8
      $region20: #{fno3d_backbone_forward.8} parent=15 // pred_fallthru
        _
      // Predicated region
      $region21: #{fno3d_backbone_forward.8} parent=15 // pred_check
        %p114 = pneg %p54
      $region22: #{fno3d_backbone_forward.8} parent=15 // pred_check_branch
        %116 = sbr.rel (%p114) target = $region24
      $region23: #{fno3d_backbone_forward.8} parent=15 // pred_region
        %s117 = smul.u32 8, %s8
        %p118 = scmp.lt.s32.totalorder %s117, 47
        %s119 = scalar_select %p118, %s117, 47
        %s120 = smul.addr %s119, 16
        %s121 = smul.addr %s120, 8
        %s122 = scalar_lea.vmem %s1, %s121
        %s123 = smul.u32 8, %s8
      $region24: #{fno3d_backbone_forward.8} parent=15 // pred_fallthru
        _
    $region16: #{fno3d_backbone_forward.8} parent=5 // pred_fallthru
      _
    %p124 = scmp.le.s32.totalorder 1, %s8
    %p125 = scmp.lt.s32.totalorder %s8, 7
    %p126 = pnand %p124, %p125
    %p127 = pneg %p126
    // Predicated region
    $region25: #{fno3d_backbone_forward.8} parent=5 // pred_check
      _
    $region26: #{fno3d_backbone_forward.8} parent=5 // pred_check_branch
      %129 = sbr.rel (%p126) target = $region28
    $region27: #{fno3d_backbone_forward.8} parent=5 // pred_region
      %s130 = ssub.s32 %s8, 1
      %s131 = smul.u32 8, %s13
      %p132 = scmp.lt.s32.totalorder %s131, 47
      %s133 = scalar_select %p132, %s131, 47
      %s134 = smul.addr %s133, 2
      %s135 = scalar_lea.vmem %s0, %s134
      %p136 = pneg %p34
      %p137 = pneg %p31
      %s138 = smul.u32 8, %s13
      %p139 = scmp.lt.s32.totalorder %s138, 47
      %s140 = scalar_select %p139, %s138, 47
      %s141 = smul.addr %s140, 16
      %s142 = smul.addr %s141, 8
      %s143 = scalar_lea.vmem %s1, %s142
      %p144 = pneg %p60
      %p145 = pneg %p57
      %p146 = pneg %p86
      %p147 = pneg %p83
      %s148 = smul.u32 8, %s13
      %p149 = scmp.lt.s32.totalorder %s148, 47
      %s150 = scalar_select %p149, %s148, 47
      %s151 = smul.addr %s150, 2
      %s152 = scalar_lea.vmem %s2, %s151
      %s153 = smul.u32 8, %s13
      %p154 = scmp.lt.s32.totalorder %s153, 47
      %s155 = scalar_select %p154, %s153, 47
      %s156 = smul.addr %s155, 2
      %s157 = scalar_lea.vmem %s0, %s156
      %s158 = smul.u32 8, %s13
      %s159 = smul.u32 8, %s13
      %p160 = scmp.lt.s32.totalorder %s159, 47
      %s161 = scalar_select %p160, %s159, 47
      %s162 = smul.addr %s161, 16
      %s163 = smul.addr %s162, 8
      %s164 = scalar_lea.vmem %s1, %s163
      %s165 = smul.u32 8, %s13
      %s166 = smul.u32 8, %s13
      %p167 = scmp.lt.s32.totalorder %s166, 47
      %s168 = scalar_select %p167, %s166, 47
      %s169 = smul.addr %s168, 2
      %s170 = scalar_lea.vmem %s2, %s169
      %s171 = smul.u32 8, %s13
      %v172 = vld [vmem:[%s157] sm:$0x3]
      %v173 = vld [vmem:[%s157 + $0x2] sm:$0x3]
      %v174 = vld [vmem:[%s157 + $0x4] sm:$0x3]
      %v175 = vld [vmem:[%s157 + $0x6] sm:$0x3]
      %v176 = vld [vmem:[%s157 + $0x8] sm:$0x3]
      %v177 = vld [vmem:[%s157 + $0xa] sm:$0x3]
      %v178 = vld [vmem:[%s157 + $0xc] sm:$0x3]
      %v179 = vld [vmem:[%s157 + $0xe] sm:$0x3]
      %v180 = vld [vmem:[%s164] sm:$0xff]
      %v181 = vld [vmem:[%s164 + $0x8] sm:$0xff]
      %v182 = vld [vmem:[%s164 + $0x10] sm:$0xff]
      %v183 = vld [vmem:[%s164 + $0x18] sm:$0xff]
      %v184 = vld [vmem:[%s164 + $0x20] sm:$0xff]
      %v185 = vld [vmem:[%s164 + $0x28] sm:$0xff]
      %v186 = vld [vmem:[%s164 + $0x30] sm:$0xff]
      %v187 = vld [vmem:[%s164 + $0x38] sm:$0xff]
      %v188 = vld [vmem:[%s164 + $0x40] sm:$0xff]
      %v189 = vld [vmem:[%s164 + $0x48] sm:$0xff]
      %v190 = vld [vmem:[%s164 + $0x50] sm:$0xff]
      %v191 = vld [vmem:[%s164 + $0x58] sm:$0xff]
      %v192 = vld [vmem:[%s164 + $0x60] sm:$0xff]
      %v193 = vld [vmem:[%s164 + $0x68] sm:$0xff]
      %v194 = vld [vmem:[%s164 + $0x70] sm:$0xff]
      %v195 = vld [vmem:[%s164 + $0x78] sm:$0xff]
      %v196 = vld [vmem:[%s164 + $0x80] sm:$0xff]
      %v197 = vld [vmem:[%s164 + $0x88] sm:$0xff]
      %v198 = vld [vmem:[%s164 + $0x90] sm:$0xff]
      %v199 = vld [vmem:[%s164 + $0x98] sm:$0xff]
      %v200 = vld [vmem:[%s164 + $0xa0] sm:$0xff]
      %v201 = vld [vmem:[%s164 + $0xa8] sm:$0xff]
      %v202 = vld [vmem:[%s164 + $0xb0] sm:$0xff]
      %v203 = vld [vmem:[%s164 + $0xb8] sm:$0xff]
      %v204 = vld [vmem:[%s164 + $0xc0] sm:$0xff]
      %v205 = vld [vmem:[%s164 + $0xc8] sm:$0xff]
      %v206 = vld [vmem:[%s164 + $0xd0] sm:$0xff]
      %v207 = vld [vmem:[%s164 + $0xd8] sm:$0xff]
      %v208 = vld [vmem:[%s164 + $0xe0] sm:$0xff]
      %v209 = vld [vmem:[%s164 + $0xe8] sm:$0xff]
      %v210 = vld [vmem:[%s164 + $0xf0] sm:$0xff]
      %v211 = vld [vmem:[%s164 + $0xf8] sm:$0xff]
      %v212 = vld [vmem:[%s164 + $0x100] sm:$0xff]
      %v213 = vld [vmem:[%s164 + $0x108] sm:$0xff]
      %v214 = vld [vmem:[%s164 + $0x110] sm:$0xff]
      %v215 = vld [vmem:[%s164 + $0x118] sm:$0xff]
      %v216 = vld [vmem:[%s164 + $0x120] sm:$0xff]
      %v217 = vld [vmem:[%s164 + $0x128] sm:$0xff]
      %v218 = vld [vmem:[%s164 + $0x130] sm:$0xff]
      %v219 = vld [vmem:[%s164 + $0x138] sm:$0xff]
      %v220 = vld [vmem:[%s164 + $0x140] sm:$0xff]
      %v221 = vld [vmem:[%s164 + $0x148] sm:$0xff]
      %v222 = vld [vmem:[%s164 + $0x150] sm:$0xff]
      %v223 = vld [vmem:[%s164 + $0x158] sm:$0xff]
      %v224 = vld [vmem:[%s164 + $0x160] sm:$0xff]
      %v225 = vld [vmem:[%s164 + $0x168] sm:$0xff]
      %v226 = vld [vmem:[%s164 + $0x170] sm:$0xff]
      %v227 = vld [vmem:[%s164 + $0x178] sm:$0xff]
      %v228 = vld [vmem:[%s164 + $0x180] sm:$0xff]
      %v229 = vld [vmem:[%s164 + $0x188] sm:$0xff]
      %v230 = vld [vmem:[%s164 + $0x190] sm:$0xff]
      %v231 = vld [vmem:[%s164 + $0x198] sm:$0xff]
      %v232 = vld [vmem:[%s164 + $0x1a0] sm:$0xff]
      %v233 = vld [vmem:[%s164 + $0x1a8] sm:$0xff]
      %v234 = vld [vmem:[%s164 + $0x1b0] sm:$0xff]
      %v235 = vld [vmem:[%s164 + $0x1b8] sm:$0xff]
      %v236 = vld [vmem:[%s164 + $0x1c0] sm:$0xff]
      %v237 = vld [vmem:[%s164 + $0x1c8] sm:$0xff]
      %v238 = vld [vmem:[%s164 + $0x1d0] sm:$0xff]
      %v239 = vld [vmem:[%s164 + $0x1d8] sm:$0xff]
      %v240 = vld [vmem:[%s164 + $0x1e0] sm:$0xff]
      %v241 = vld [vmem:[%s164 + $0x1e8] sm:$0xff]
      %v242 = vld [vmem:[%s164 + $0x1f0] sm:$0xff]
      %v243 = vld [vmem:[%s164 + $0x1f8] sm:$0xff]
      %v244 = vld [vmem:[%s164 + $0x200] sm:$0xff]
      %v245 = vld [vmem:[%s164 + $0x208] sm:$0xff]
      %v246 = vld [vmem:[%s164 + $0x210] sm:$0xff]
      %v247 = vld [vmem:[%s164 + $0x218] sm:$0xff]
      %v248 = vld [vmem:[%s164 + $0x220] sm:$0xff]
      %v249 = vld [vmem:[%s164 + $0x228] sm:$0xff]
      %v250 = vld [vmem:[%s164 + $0x230] sm:$0xff]
      %v251 = vld [vmem:[%s164 + $0x238] sm:$0xff]
      %v252 = vld [vmem:[%s164 + $0x240] sm:$0xff]
      %v253 = vld [vmem:[%s164 + $0x248] sm:$0xff]
      %v254 = vld [vmem:[%s164 + $0x250] sm:$0xff]
      %v255 = vld [vmem:[%s164 + $0x258] sm:$0xff]
      %v256 = vld [vmem:[%s164 + $0x260] sm:$0xff]
      %v257 = vld [vmem:[%s164 + $0x268] sm:$0xff]
      %v258 = vld [vmem:[%s164 + $0x270] sm:$0xff]
      %v259 = vld [vmem:[%s164 + $0x278] sm:$0xff]
      %v260 = vld [vmem:[%s164 + $0x280] sm:$0xff]
      %v261 = vld [vmem:[%s164 + $0x288] sm:$0xff]
      %v262 = vld [vmem:[%s164 + $0x290] sm:$0xff]
      %v263 = vld [vmem:[%s164 + $0x298] sm:$0xff]
      %v264 = vld [vmem:[%s164 + $0x2a0] sm:$0xff]
      %v265 = vld [vmem:[%s164 + $0x2a8] sm:$0xff]
      %v266 = vld [vmem:[%s164 + $0x2b0] sm:$0xff]
      %v267 = vld [vmem:[%s164 + $0x2b8] sm:$0xff]
      %v268 = vld [vmem:[%s164 + $0x2c0] sm:$0xff]
      %v269 = vld [vmem:[%s164 + $0x2c8] sm:$0xff]
      %v270 = vld [vmem:[%s164 + $0x2d0] sm:$0xff]
      %v271 = vld [vmem:[%s164 + $0x2d8] sm:$0xff]
      %v272 = vld [vmem:[%s164 + $0x2e0] sm:$0xff]
      %v273 = vld [vmem:[%s164 + $0x2e8] sm:$0xff]
      %v274 = vld [vmem:[%s164 + $0x2f0] sm:$0xff]
      %v275 = vld [vmem:[%s164 + $0x2f8] sm:$0xff]
      %v276 = vld [vmem:[%s164 + $0x300] sm:$0xff]
      %v277 = vld [vmem:[%s164 + $0x308] sm:$0xff]
      %v278 = vld [vmem:[%s164 + $0x310] sm:$0xff]
      %v279 = vld [vmem:[%s164 + $0x318] sm:$0xff]
      %v280 = vld [vmem:[%s164 + $0x320] sm:$0xff]
      %v281 = vld [vmem:[%s164 + $0x328] sm:$0xff]
      %v282 = vld [vmem:[%s164 + $0x330] sm:$0xff]
      %v283 = vld [vmem:[%s164 + $0x338] sm:$0xff]
      %v284 = vld [vmem:[%s164 + $0x340] sm:$0xff]
      %v285 = vld [vmem:[%s164 + $0x348] sm:$0xff]
      %v286 = vld [vmem:[%s164 + $0x350] sm:$0xff]
      %v287 = vld [vmem:[%s164 + $0x358] sm:$0xff]
      %v288 = vld [vmem:[%s164 + $0x360] sm:$0xff]
      %v289 = vld [vmem:[%s164 + $0x368] sm:$0xff]
      %v290 = vld [vmem:[%s164 + $0x370] sm:$0xff]
      %v291 = vld [vmem:[%s164 + $0x378] sm:$0xff]
      %v292 = vld [vmem:[%s164 + $0x380] sm:$0xff]
      %v293 = vld [vmem:[%s164 + $0x388] sm:$0xff]
      %v294 = vld [vmem:[%s164 + $0x390] sm:$0xff]
      %v295 = vld [vmem:[%s164 + $0x398] sm:$0xff]
      %v296 = vld [vmem:[%s164 + $0x3a0] sm:$0xff]
      %v297 = vld [vmem:[%s164 + $0x3a8] sm:$0xff]
      %v298 = vld [vmem:[%s164 + $0x3b0] sm:$0xff]
      %v299 = vld [vmem:[%s164 + $0x3b8] sm:$0xff]
      %v300 = vld [vmem:[%s164 + $0x3c0] sm:$0xff]
      %v301 = vld [vmem:[%s164 + $0x3c8] sm:$0xff]
      %v302 = vld [vmem:[%s164 + $0x3d0] sm:$0xff]
      %v303 = vld [vmem:[%s164 + $0x3d8] sm:$0xff]
      %v304 = vld [vmem:[%s164 + $0x3e0] sm:$0xff]
      %v305 = vld [vmem:[%s164 + $0x3e8] sm:$0xff]
      %v306 = vld [vmem:[%s164 + $0x3f0] sm:$0xff]
      %v307 = vld [vmem:[%s164 + $0x3f8] sm:$0xff]
      %308 = vmatpush.msra.mxu0 %v195
      %309 = vmatpush.msra.mxu0 %v194
      %310 = vmatpush.msra.mxu0 %v193
      %311 = vmatpush.msra.mxu0 %v192
      %312 = vmatpush.msra.mxu0 %v191
      %313 = vmatpush.msra.mxu0 %v190
      %314 = vmatpush.msra.mxu0 %v189
      %315 = vmatpush.msra.mxu0 %v188
      %316 = vmatpush.msra.mxu0 %v187
      %317 = vmatpush.msra.mxu0 %v186
      %318 = vmatpush.msra.mxu0 %v185
      %319 = vmatpush.msra.mxu0 %v184
      %320 = vmatpush.msra.mxu0 %v183
      %321 = vmatpush.msra.mxu0 %v182
      %322 = vmatpush.msra.mxu0 %v181
      %323 = vmatpush.msra.mxu0 %v180
      %324 = vmatmul.f32.gmra.mxu0 %v172
      %v325 = vpop.f32.mrf.mxu0
      %v326 = vadd.f32 0.0, %v325
      %327 = vdwg.mxu0
      %328 = vmatpush.msra.mxu0 %v211
      %329 = vmatpush.msra.mxu0 %v210
      %330 = vmatpush.msra.mxu0 %v209
      %331 = vmatpush.msra.mxu0 %v208
      %332 = vmatpush.msra.mxu0 %v207
      %333 = vmatpush.msra.mxu0 %v206
      %334 = vmatpush.msra.mxu0 %v205
      %335 = vmatpush.msra.mxu0 %v204
      %336 = vmatpush.msra.mxu0 %v203
      %337 = vmatpush.msra.mxu0 %v202
      %338 = vmatpush.msra.mxu0 %v201
      %339 = vmatpush.msra.mxu0 %v200
      %340 = vmatpush.msra.mxu0 %v199
      %341 = vmatpush.msra.mxu0 %v198
      %342 = vmatpush.msra.mxu0 %v197
      %343 = vmatpush.msra.mxu0 %v196
      %344 = vmatmul.f32.gmra.mxu0 %v173
      %v345 = vpop.f32.mrf.mxu0
      %v346 = vadd.f32 0.0, %v345
      %347 = vdwg.mxu0
      %348 = vmatpush.msra.mxu0 %v227
      %349 = vmatpush.msra.mxu0 %v226
      %350 = vmatpush.msra.mxu0 %v225
      %351 = vmatpush.msra.mxu0 %v224
      %352 = vmatpush.msra.mxu0 %v223
      %353 = vmatpush.msra.mxu0 %v222
      %354 = vmatpush.msra.mxu0 %v221
      %355 = vmatpush.msra.mxu0 %v220
      %356 = vmatpush.msra.mxu0 %v219
      %357 = vmatpush.msra.mxu0 %v218
      %358 = vmatpush.msra.mxu0 %v217
      %359 = vmatpush.msra.mxu0 %v216
      %360 = vmatpush.msra.mxu0 %v215
      %361 = vmatpush.msra.mxu0 %v214
      %362 = vmatpush.msra.mxu0 %v213
      %363 = vmatpush.msra.mxu0 %v212
      %364 = vmatmul.f32.gmra.mxu0 %v174
      %v365 = vpop.f32.mrf.mxu0
      %v366 = vadd.f32 0.0, %v365
      %367 = vdwg.mxu0
      %368 = vmatpush.msra.mxu0 %v243
      %369 = vmatpush.msra.mxu0 %v242
      %370 = vmatpush.msra.mxu0 %v241
      %371 = vmatpush.msra.mxu0 %v240
      %372 = vmatpush.msra.mxu0 %v239
      %373 = vmatpush.msra.mxu0 %v238
      %374 = vmatpush.msra.mxu0 %v237
      %375 = vmatpush.msra.mxu0 %v236
      %376 = vmatpush.msra.mxu0 %v235
      %377 = vmatpush.msra.mxu0 %v234
      %378 = vmatpush.msra.mxu0 %v233
      %379 = vmatpush.msra.mxu0 %v232
      %380 = vmatpush.msra.mxu0 %v231
      %381 = vmatpush.msra.mxu0 %v230
      %382 = vmatpush.msra.mxu0 %v229
      %383 = vmatpush.msra.mxu0 %v228
      %384 = vmatmul.f32.gmra.mxu0 %v175
      %v385 = vpop.f32.mrf.mxu0
      %v386 = vadd.f32 0.0, %v385
      %387 = vdwg.mxu0
      %388 = vmatpush.msra.mxu0 %v259
      %389 = vmatpush.msra.mxu0 %v258
      %390 = vmatpush.msra.mxu0 %v257
      %391 = vmatpush.msra.mxu0 %v256
      %392 = vmatpush.msra.mxu0 %v255
      %393 = vmatpush.msra.mxu0 %v254
      %394 = vmatpush.msra.mxu0 %v253
      %395 = vmatpush.msra.mxu0 %v252
      %396 = vmatpush.msra.mxu0 %v251
      %397 = vmatpush.msra.mxu0 %v250
      %398 = vmatpush.msra.mxu0 %v249
      %399 = vmatpush.msra.mxu0 %v248
      %400 = vmatpush.msra.mxu0 %v247
      %401 = vmatpush.msra.mxu0 %v246
      %402 = vmatpush.msra.mxu0 %v245
      %403 = vmatpush.msra.mxu0 %v244
      %404 = vmatmul.f32.gmra.mxu0 %v176
      %v405 = vpop.f32.mrf.mxu0
      %v406 = vadd.f32 0.0, %v405
      %407 = vdwg.mxu0
      %408 = vmatpush.msra.mxu0 %v275
      %409 = vmatpush.msra.mxu0 %v274
      %410 = vmatpush.msra.mxu0 %v273
      %411 = vmatpush.msra.mxu0 %v272
      %412 = vmatpush.msra.mxu0 %v271
      %413 = vmatpush.msra.mxu0 %v270
      %414 = vmatpush.msra.mxu0 %v269
      %415 = vmatpush.msra.mxu0 %v268
      %416 = vmatpush.msra.mxu0 %v267
      %417 = vmatpush.msra.mxu0 %v266
      %418 = vmatpush.msra.mxu0 %v265
      %419 = vmatpush.msra.mxu0 %v264
      %420 = vmatpush.msra.mxu0 %v263
      %421 = vmatpush.msra.mxu0 %v262
      %422 = vmatpush.msra.mxu0 %v261
      %423 = vmatpush.msra.mxu0 %v260
      %424 = vmatmul.f32.gmra.mxu0 %v177
      %v425 = vpop.f32.mrf.mxu0
      %v426 = vadd.f32 0.0, %v425
      %427 = vdwg.mxu0
      %428 = vmatpush.msra.mxu0 %v291
      %429 = vmatpush.msra.mxu0 %v290
      %430 = vmatpush.msra.mxu0 %v289
      %431 = vmatpush.msra.mxu0 %v288
      %432 = vmatpush.msra.mxu0 %v287
      %433 = vmatpush.msra.mxu0 %v286
      %434 = vmatpush.msra.mxu0 %v285
      %435 = vmatpush.msra.mxu0 %v284
      %436 = vmatpush.msra.mxu0 %v283
      %437 = vmatpush.msra.mxu0 %v282
      %438 = vmatpush.msra.mxu0 %v281
      %439 = vmatpush.msra.mxu0 %v280
      %440 = vmatpush.msra.mxu0 %v279
      %441 = vmatpush.msra.mxu0 %v278
      %442 = vmatpush.msra.mxu0 %v277
      %443 = vmatpush.msra.mxu0 %v276
      %444 = vmatmul.f32.gmra.mxu0 %v178
      %v445 = vpop.f32.mrf.mxu0
      %v446 = vadd.f32 0.0, %v445
      %447 = vdwg.mxu0
      %448 = vmatpush.msra.mxu0 %v307
      %449 = vmatpush.msra.mxu0 %v306
      %450 = vmatpush.msra.mxu0 %v305
      %451 = vmatpush.msra.mxu0 %v304
      %452 = vmatpush.msra.mxu0 %v303
      %453 = vmatpush.msra.mxu0 %v302
      %454 = vmatpush.msra.mxu0 %v301
      %455 = vmatpush.msra.mxu0 %v300
      %456 = vmatpush.msra.mxu0 %v299
      %457 = vmatpush.msra.mxu0 %v298
      %458 = vmatpush.msra.mxu0 %v297
      %459 = vmatpush.msra.mxu0 %v296
      %460 = vmatpush.msra.mxu0 %v295
      %461 = vmatpush.msra.mxu0 %v294
      %462 = vmatpush.msra.mxu0 %v293
      %463 = vmatpush.msra.mxu0 %v292
      %464 = vmatmul.f32.gmra.mxu0 %v179
      %v465 = vpop.f32.mrf.mxu0
      %v466 = vadd.f32 0.0, %v465
      %467 = vdwg.mxu0
      %468 = vst [vmem:[%s170] sm:$0x3] %v326
      %469 = vst [vmem:[%s170 + $0x2] sm:$0x3] %v346
      %470 = vst [vmem:[%s170 + $0x4] sm:$0x3] %v366
      %471 = vst [vmem:[%s170 + $0x6] sm:$0x3] %v386
      %472 = vst [vmem:[%s170 + $0x8] sm:$0x3] %v406
      %473 = vst [vmem:[%s170 + $0xa] sm:$0x3] %v426
      %474 = vst [vmem:[%s170 + $0xc] sm:$0x3] %v446
      %475 = vst [vmem:[%s170 + $0xe] sm:$0x3] %v466
      %s476 = smul.u32 8, %s13
      %p477 = scmp.lt.s32.totalorder %s476, 47
      %s478 = scalar_select %p477, %s476, 47
      %s479 = smul.addr %s478, 2
      %s480 = scalar_lea.vmem %s2, %s479
      // Predicated region
      $region29: #{fno3d_backbone_forward.8} parent=27 // pred_check
        %p481 = pneg %p83
      $region30: #{fno3d_backbone_forward.8} parent=27 // pred_check_branch
        %483 = sbr.rel (%p481) target = $region32
      $region31: #{fno3d_backbone_forward.8} parent=27 // pred_region
        %s484 = smul.u32 8, %s13
      $region32: #{fno3d_backbone_forward.8} parent=27 // pred_fallthru
        _
    $region28: #{fno3d_backbone_forward.8} parent=5 // pred_fallthru
      _
    %p485 = scmp.le.s32.totalorder 2, %s8
    // Predicated region
    $region33: #{fno3d_backbone_forward.8} parent=5 // pred_check
      %p486 = pneg %p485
    $region34: #{fno3d_backbone_forward.8} parent=5 // pred_check_branch
      %488 = sbr.rel (%p486) target = $region36
    $region35: #{fno3d_backbone_forward.8} parent=5 // pred_region
      %s489 = ssub.s32 %s8, 2
      // Predicated region
      $region37: #{fno3d_backbone_forward.8} parent=35 // pred_check
        %p490 = pneg %p89
      $region38: #{fno3d_backbone_forward.8} parent=35 // pred_check_branch
        %492 = sbr.rel (%p490) target = $region40
      $region39: #{fno3d_backbone_forward.8} parent=35 // pred_region
        %s493 = smul.u32 8, %s14
        %p494 = scmp.lt.s32.totalorder %s493, 47
        %s495 = scalar_select %p494, %s493, 47
        %s496 = smul.addr %s495, 2
        %s497 = scalar_lea.vmem %s2, %s496
      $region40: #{fno3d_backbone_forward.8} parent=35 // pred_fallthru
        _
    $region36: #{fno3d_backbone_forward.8} parent=5 // pred_fallthru
      _
  $region6: #{fno3d_backbone_forward.8} parent=0 // loop_footer
    %s12 = sadd.s32 1, %s8
  $region7: #{fno3d_backbone_forward.8} parent=0 // loop_footer_branch
    %7 = sbr.rel target = $region3
  $region8: #{fno3d_backbone_forward.8} parent=0 // loop_exit
    _

// kernel: reverse.6
$region0: #{reverse.6}
  #allocation0 [shape = 's32[1]{0}', space=sflag, size = 0x4, scoped, tag = 'scoped memory for reverse.6']
  %s0 = inlined_call_operand.vmem [shape: f32[16,2,8,8,3], index: 0, kind: input, shape index: {}]
  %s1 = inlined_call_operand.vmem [shape: f32[16,2,8,8,3], index: 1, kind: output, shape index: {}]
  %s2 = scalar_lea.vmem %s0, 128
  %v3 = vld [vmem:[%s2] sm:$0xff]
  %4 = vst [vmem:[%s1] sm:$0xff] %v3
  %s5 = scalar_lea.vmem %s0, 320
  %v6 = vld [vmem:[%s5] sm:$0xff]
  %s7 = scalar_lea.vmem %s1, 192
  %8 = vst [vmem:[%s7] sm:$0xff] %v6
  %s9 = scalar_lea.vmem %s0, 64
  %v10 = vld [vmem:[%s9] sm:$0xff]
  %s11 = scalar_lea.vmem %s1, 64
  %12 = vst [vmem:[%s11] sm:$0xff] %v10
  %s13 = scalar_lea.vmem %s0, 256
  %v14 = vld [vmem:[%s13] sm:$0xff]
  %s15 = scalar_lea.vmem %s1, 256
  %16 = vst [vmem:[%s15] sm:$0xff] %v14
  %v17 = vld [vmem:[%s0] sm:$0xff]
  %s18 = scalar_lea.vmem %s1, 128
  %19 = vst [vmem:[%s18] sm:$0xff] %v17
  %s20 = scalar_lea.vmem %s0, 192
  %v21 = vld [vmem:[%s20] sm:$0xff]
  %s22 = scalar_lea.vmem %s1, 320
  %23 = vst [vmem:[%s22] sm:$0xff] %v21
  %s24 = scalar_lea.vmem %s0, 136
  %v25 = vld [vmem:[%s24] sm:$0xff]
  %s26 = scalar_lea.vmem %s1, 8
  %27 = vst [vmem:[%s26] sm:$0xff] %v25
  %s28 = scalar_lea.vmem %s0, 328
  %v29 = vld [vmem:[%s28] sm:$0xff]
  %s30 = scalar_lea.vmem %s1, 200
  %31 = vst [vmem:[%s30] sm:$0xff] %v29
  %s32 = scalar_lea.vmem %s0, 72
  %v33 = vld [vmem:[%s32] sm:$0xff]
  %s34 = scalar_lea.vmem %s1, 72
  %35 = vst [vmem:[%s34] sm:$0xff] %v33
  %s36 = scalar_lea.vmem %s0, 264
  %v37 = vld [vmem:[%s36] sm:$0xff]
  %s38 = scalar_lea.vmem %s1, 264
  %39 = vst [vmem:[%s38] sm:$0xff] %v37
  %s40 = scalar_lea.vmem %s0, 8
  %v41 = vld [vmem:[%s40] sm:$0xff]
  %s42 = scalar_lea.vmem %s1, 136
  %43 = vst [vmem:[%s42] sm:$0xff] %v41
  %s44 = scalar_lea.vmem %s0, 200
  %v45 = vld [vmem:[%s44] sm:$0xff]
  %s46 = scalar_lea.vmem %s1, 328
  %47 = vst [vmem:[%s46] sm:$0xff] %v45
  %s48 = scalar_lea.vmem %s0, 144
  %v49 = vld [vmem:[%s48] sm:$0xff]
  %s50 = scalar_lea.vmem %s1, 16
  %51 = vst [vmem:[%s50] sm:$0xff] %v49
  %s52 = scalar_lea.vmem %s0, 336
  %v53 = vld [vmem:[%s52] sm:$0xff]
  %s54 = scalar_lea.vmem %s1, 208
  %55 = vst [vmem:[%s54] sm:$0xff] %v53
  %s56 = scalar_lea.vmem %s0, 80
  %v57 = vld [vmem:[%s56] sm:$0xff]
  %s58 = scalar_lea.vmem %s1, 80
  %59 = vst [vmem:[%s58] sm:$0xff] %v57
  %s60 = scalar_lea.vmem %s0, 272
  %v61 = vld [vmem:[%s60] sm:$0xff]
  %s62 = scalar_lea.vmem %s1, 272
  %63 = vst [vmem:[%s62] sm:$0xff] %v61
  %s64 = scalar_lea.vmem %s0, 16
  %v65 = vld [vmem:[%s64] sm:$0xff]
  %s66 = scalar_lea.vmem %s1, 144
  %67 = vst [vmem:[%s66] sm:$0xff] %v65
  %s68 = scalar_lea.vmem %s0, 208
  %v69 = vld [vmem:[%s68] sm:$0xff]
  %s70 = scalar_lea.vmem %s1, 336
  %71 = vst [vmem:[%s70] sm:$0xff] %v69
  %s72 = scalar_lea.vmem %s0, 152
  %v73 = vld [vmem:[%s72] sm:$0xff]
  %s74 = scalar_lea.vmem %s1, 24
  %75 = vst [vmem:[%s74] sm:$0xff] %v73
  %s76 = scalar_lea.vmem %s0, 344
  %v77 = vld [vmem:[%s76] sm:$0xff]
  %s78 = scalar_lea.vmem %s1, 216
  %79 = vst [vmem:[%s78] sm:$0xff] %v77
  %s80 = scalar_lea.vmem %s0, 88
  %v81 = vld [vmem:[%s80] sm:$0xff]
  %s82 = scalar_lea.vmem %s1, 88
  %83 = vst [vmem:[%s82] sm:$0xff] %v81
  %s84 = scalar_lea.vmem %s0, 280
  %v85 = vld [vmem:[%s84] sm:$0xff]
  %s86 = scalar_lea.vmem %s1, 280
  %87 = vst [vmem:[%s86] sm:$0xff] %v85
  %s88 = scalar_lea.vmem %s0, 24
  %v89 = vld [vmem:[%s88] sm:$0xff]
  %s90 = scalar_lea.vmem %s1, 152
  %91 = vst [vmem:[%s90] sm:$0xff] %v89
  %s92 = scalar_lea.vmem %s0, 216
  %v93 = vld [vmem:[%s92] sm:$0xff]
  %s94 = scalar_lea.vmem %s1, 344
  %95 = vst [vmem:[%s94] sm:$0xff] %v93
  %s96 = scalar_lea.vmem %s0, 160
  %v97 = vld [vmem:[%s96] sm:$0xff]
  %s98 = scalar_lea.vmem %s1, 32
  %99 = vst [vmem:[%s98] sm:$0xff] %v97
  %s100 = scalar_lea.vmem %s0, 352
  %v101 = vld [vmem:[%s100] sm:$0xff]
  %s102 = scalar_lea.vmem %s1, 224
  %103 = vst [vmem:[%s102] sm:$0xff] %v101
  %s104 = scalar_lea.vmem %s0, 96
  %v105 = vld [vmem:[%s104] sm:$0xff]
  %s106 = scalar_lea.vmem %s1, 96
  %107 = vst [vmem:[%s106] sm:$0xff] %v105
  %s108 = scalar_lea.vmem %s0, 288
  %v109 = vld [vmem:[%s108] sm:$0xff]
  %s110 = scalar_lea.vmem %s1, 288
  %111 = vst [vmem:[%s110] sm:$0xff] %v109
  %s112 = scalar_lea.vmem %s0, 32
  %v113 = vld [vmem:[%s112] sm:$0xff]
  %s114 = scalar_lea.vmem %s1, 160
  %115 = vst [vmem:[%s114] sm:$0xff] %v113
  %s116 = scalar_lea.vmem %s0, 224
  %v117 = vld [vmem:[%s116] sm:$0xff]
  %s118 = scalar_lea.vmem %s1, 352
  %119 = vst [vmem:[%s118] sm:$0xff] %v117
  %s120 = scalar_lea.vmem %s0, 168
  %v121 = vld [vmem:[%s120] sm:$0xff]
  %s122 = scalar_lea.vmem %s1, 40
  %123 = vst [vmem:[%s122] sm:$0xff] %v121
  %s124 = scalar_lea.vmem %s0, 360
  %v125 = vld [vmem:[%s124] sm:$0xff]
  %s126 = scalar_lea.vmem %s1, 232
  %127 = vst [vmem:[%s126] sm:$0xff] %v125
  %s128 = scalar_lea.vmem %s0, 104
  %v129 = vld [vmem:[%s128] sm:$0xff]
  %s130 = scalar_lea.vmem %s1, 104
  %131 = vst [vmem:[%s130] sm:$0xff] %v129
  %s132 = scalar_lea.vmem %s0, 296
  %v133 = vld [vmem:[%s132] sm:$0xff]
  %s134 = scalar_lea.vmem %s1, 296
  %135 = vst [vmem:[%s134] sm:$0xff] %v133
  %s136 = scalar_lea.vmem %s0, 40
  %v137 = vld [vmem:[%s136] sm:$0xff]
  %s138 = scalar_lea.vmem %s1, 168
  %139 = vst [vmem:[%s138] sm:$0xff] %v137
  %s140 = scalar_lea.vmem %s0, 232
  %v141 = vld [vmem:[%s140] sm:$0xff]
  %s142 = scalar_lea.vmem %s1, 360
  %143 = vst [vmem:[%s142] sm:$0xff] %v141
  %s144 = scalar_lea.vmem %s0, 176
  %v145 = vld [vmem:[%s144] sm:$0xff]
  %s146 = scalar_lea.vmem %s1, 48
  %147 = vst [vmem:[%s146] sm:$0xff] %v145
  %s148 = scalar_lea.vmem %s0, 368
  %v149 = vld [vmem:[%s148] sm:$0xff]
  %s150 = scalar_lea.vmem %s1, 240
  %151 = vst [vmem:[%s150] sm:$0xff] %v149
  %s152 = scalar_lea.vmem %s0, 112
  %v153 = vld [vmem:[%s152] sm:$0xff]
  %s154 = scalar_lea.vmem %s1, 112
  %155 = vst [vmem:[%s154] sm:$0xff] %v153
  %s156 = scalar_lea.vmem %s0, 304
  %v157 = vld [vmem:[%s156] sm:$0xff]
  %s158 = scalar_lea.vmem %s1, 304
  %159 = vst [vmem:[%s158] sm:$0xff] %v157
  %s160 = scalar_lea.vmem %s0, 48
  %v161 = vld [vmem:[%s160] sm:$0xff]
  %s162 = scalar_lea.vmem %s1, 176
  %163 = vst [vmem:[%s162] sm:$0xff] %v161
  %s164 = scalar_lea.vmem %s0, 240
  %v165 = vld [vmem:[%s164] sm:$0xff]
  %s166 = scalar_lea.vmem %s1, 368
  %167 = vst [vmem:[%s166] sm:$0xff] %v165
  %s168 = scalar_lea.vmem %s0, 184
  %v169 = vld [vmem:[%s168] sm:$0xff]
  %s170 = scalar_lea.vmem %s1, 56
  %171 = vst [vmem:[%s170] sm:$0xff] %v169
  %s172 = scalar_lea.vmem %s0, 376
  %v173 = vld [vmem:[%s172] sm:$0xff]
  %s174 = scalar_lea.vmem %s1, 248
  %175 = vst [vmem:[%s174] sm:$0xff] %v173
  %s176 = scalar_lea.vmem %s0, 120
  %v177 = vld [vmem:[%s176] sm:$0xff]
  %s178 = scalar_lea.vmem %s1, 120
  %179 = vst [vmem:[%s178] sm:$0xff] %v177
  %s180 = scalar_lea.vmem %s0, 312
  %v181 = vld [vmem:[%s180] sm:$0xff]
  %s182 = scalar_lea.vmem %s1, 312
  %183 = vst [vmem:[%s182] sm:$0xff] %v181
  %s184 = scalar_lea.vmem %s0, 56
  %v185 = vld [vmem:[%s184] sm:$0xff]
  %s186 = scalar_lea.vmem %s1, 184
  %187 = vst [vmem:[%s186] sm:$0xff] %v185
  %s188 = scalar_lea.vmem %s0, 248
  %v189 = vld [vmem:[%s188] sm:$0xff]
  %s190 = scalar_lea.vmem %s1, 376
  %191 = vst [vmem:[%s190] sm:$0xff] %v189

// kernel: fno3d_backbone_forward.9
$region0: #{fno3d_backbone_forward.9}
  #allocation0 [shape = 'u32[]', space=smem, size = 0x4, offset = 0x4, fixed_abs, tag = 'smem constant byte address 0x4 - core index']
  #allocation1 [shape = 'u32[72,128]{1,0:T(1,128)}', space=vmem, size = 0x9000, scoped, tag = 'internal scratch']
  %s0 = inlined_call_operand.vmem [shape: f32[16,16], index: 0, kind: input, shape index: {}]
  %s1 = inlined_call_operand.vmem [shape: f32[16,1024], index: 1, kind: input, shape index: {}]
  %s2 = inlined_call_operand.vmem [shape: f32[16,1], index: 2, kind: input, shape index: {}]
  %s3 = inlined_call_operand.vmem [shape: f32[16,1024], index: 3, kind: input, shape index: {}]
  %s4 = inlined_call_operand.vmem [shape: f32[16,1024], index: 4, kind: output, shape index: {}]
  %s5 = sld [smem:[#allocation0]]
  $region159: #{fno3d_backbone_forward.9} parent=0
    _
  %s7 = ssub.s32 1, %s5
  %s8 = scalar_select 0, %s7, %s5
  $region1: #{fno3d_backbone_forward.9} parent=0
    #allocation2 [shape = 'u8[16384]{0}', space=vmem, size = 0x4000, scoped, tag = 'input window, operand 1']
    #allocation3 [shape = 'u8[16384]{0}', space=vmem, size = 0x4000, scoped, tag = 'input window, operand 3']
    #allocation4 [shape = 'u8[16384]{0}', space=vmem, size = 0x4000, scoped, tag = 'output window, operand 0']
    loop: start=0, step=1, limit=10
    $region2: #{fno3d_backbone_forward.9} parent=1 // loop_pre_header
      _
    $region3: #{fno3d_backbone_forward.9} parent=1 // loop_header
      %s10 = sphi 0, %s14
      %p11 = scmp.ge.s32.totalorder %s10, 10
      %s18 = sphi 0, %s18
      %s20 = sphi 0, %s18
      %s21 = sphi 0, %s20
      %s35 = sphi 0, %s21
      %s41 = sphi 0, %s43
      %s44 = sphi 0, %s41
      %s45 = sphi 0, %s44
      %s61 = sphi 0, %s45
      %s65 = sphi 0, %s65
      %s67 = sphi 0, %s65
      %s68 = sphi 0, %s67
      %s82 = sphi 0, %s68
      %s88 = sphi 0, %s90
      %s91 = sphi 0, %s88
      %s92 = sphi 0, %s91
      %s108 = sphi 0, %s92
      %s114 = sphi 0, %s116
      %s117 = sphi 0, %s114
      %s118 = sphi 0, %s117
      %s134 = sphi 0, %s118
    $region4: #{fno3d_backbone_forward.9} parent=1 // loop_header_branch
      %13 = sbr.rel (%p11) target = $region8
    $region5: #{fno3d_backbone_forward.9} parent=1 // loop_body
      %s15 = ssub.s32 %s10, 1
      %s16 = ssub.s32 %s10, 2
      %s17 = sadd.s32 %s10, 1
      %s19 = sadd.s32 %s18, 1
      %p22 = scmp.eq.s32.totalorder %s10, 7
      %p23 = scmp.ne.s32.totalorder %s18, %s20
      %p24 = scmp.eq.s32.totalorder %s10, 0
      %p25 = por %p23, %p24
      %p26 = scmp.ne.s32.totalorder %s18, %s20
      %p27 = scmp.eq.s32.totalorder %s15, 7
      %p28 = por %p26, %p27
      %p29 = scmp.ne.s32.totalorder %s20, %s21
      %p30 = scmp.eq.s32.totalorder %s15, 0
      %p31 = por %p29, %p30
      %p32 = scmp.ne.s32.totalorder %s20, %s21
      %p33 = scmp.eq.s32.totalorder %s16, 7
      %p34 = por %p32, %p33
      %p36 = scmp.ne.s32.totalorder %s21, %s35
      %p37 = scmp.eq.s32.totalorder %s16, 0
      %p38 = por %p36, %p37
      %s39 = ssub.s32 %s10, %s17
      %p40 = scmp.eq.s32.totalorder %s39, 0
      %s42 = sadd.s32 %s41, 1
      %s43 = scalar_select %p40, %s41, %s42
      %p46 = pneg %p40
      %p47 = scmp.eq.s32.totalorder %s10, 7
      %p48 = por %p46, %p47
      %p49 = scmp.ne.s32.totalorder %s41, %s44
      %p50 = scmp.eq.s32.totalorder %s10, 0
      %p51 = por %p49, %p50
      %p52 = scmp.ne.s32.totalorder %s41, %s44
      %p53 = scmp.eq.s32.totalorder %s15, 7
      %p54 = por %p52, %p53
      %p55 = scmp.ne.s32.totalorder %s44, %s45
      %p56 = scmp.eq.s32.totalorder %s15, 0
      %p57 = por %p55, %p56
      %p58 = scmp.ne.s32.totalorder %s44, %s45
      %p59 = scmp.eq.s32.totalorder %s16, 7
      %p60 = por %p58, %p59
      %p62 = scmp.ne.s32.totalorder %s45, %s61
      %p63 = scmp.eq.s32.totalorder %s16, 0
      %p64 = por %p62, %p63
      %s66 = sadd.s32 %s65, 1
      %p69 = scmp.eq.s32.totalorder %s10, 7
      %p70 = scmp.ne.s32.totalorder %s65, %s67
      %p71 = scmp.eq.s32.totalorder %s10, 0
      %p72 = por %p70, %p71
      %p73 = scmp.ne.s32.totalorder %s65, %s67
      %p74 = scmp.eq.s32.totalorder %s15, 7
      %p75 = por %p73, %p74
      %p76 = scmp.ne.s32.totalorder %s67, %s68
      %p77 = scmp.eq.s32.totalorder %s15, 0
      %p78 = por %p76, %p77
      %p79 = scmp.ne.s32.totalorder %s67, %s68
      %p80 = scmp.eq.s32.totalorder %s16, 7
      %p81 = por %p79, %p80
      %p83 = scmp.ne.s32.totalorder %s68, %s82
      %p84 = scmp.eq.s32.totalorder %s16, 0
      %p85 = por %p83, %p84
      %s86 = ssub.s32 %s10, %s17
      %p87 = scmp.eq.s32.totalorder %s86, 0
      %s89 = sadd.s32 %s88, 1
      %s90 = scalar_select %p87, %s88, %s89
      %p93 = pneg %p87
      %p94 = scmp.eq.s32.totalorder %s10, 7
      %p95 = por %p93, %p94
      %p96 = scmp.ne.s32.totalorder %s88, %s91
      %p97 = scmp.eq.s32.totalorder %s10, 0
      %p98 = por %p96, %p97
      %p99 = scmp.ne.s32.totalorder %s88, %s91
      %p100 = scmp.eq.s32.totalorder %s15, 7
      %p101 = por %p99, %p100
      %p102 = scmp.ne.s32.totalorder %s91, %s92
      %p103 = scmp.eq.s32.totalorder %s15, 0
      %p104 = por %p102, %p103
      %p105 = scmp.ne.s32.totalorder %s91, %s92
      %p106 = scmp.eq.s32.totalorder %s16, 7
      %p107 = por %p105, %p106
      %p109 = scmp.ne.s32.totalorder %s92, %s108
      %p110 = scmp.eq.s32.totalorder %s16, 0
      %p111 = por %p109, %p110
      %s112 = ssub.s32 %s10, %s17
      %p113 = scmp.eq.s32.totalorder %s112, 0
      %s115 = sadd.s32 %s114, 1
      %s116 = scalar_select %p113, %s114, %s115
      %p119 = pneg %p113
      %p120 = scmp.eq.s32.totalorder %s10, 7
      %p121 = por %p119, %p120
      %p122 = scmp.ne.s32.totalorder %s114, %s117
      %p123 = scmp.eq.s32.totalorder %s10, 0
      %p124 = por %p122, %p123
      %p125 = scmp.ne.s32.totalorder %s114, %s117
      %p126 = scmp.eq.s32.totalorder %s15, 7
      %p127 = por %p125, %p126
      %p128 = scmp.ne.s32.totalorder %s117, %s118
      %p129 = scmp.eq.s32.totalorder %s15, 0
      %p130 = por %p128, %p129
      %p131 = scmp.ne.s32.totalorder %s117, %s118
      %p132 = scmp.eq.s32.totalorder %s16, 7
      %p133 = por %p131, %p132
      %p135 = scmp.ne.s32.totalorder %s118, %s134
      %p136 = scmp.eq.s32.totalorder %s16, 0
      %p137 = por %p135, %p136
      %p138 = scmp.le.s32.totalorder 1, %s10
      %p139 = scmp.lt.s32.totalorder %s10, 9
      %p140 = pnand %p138, %p139
      %p141 = pneg %p140
      // Predicated region
      $region9: #{fno3d_backbone_forward.9} parent=5 // pred_check
        _
      $region10: #{fno3d_backbone_forward.9} parent=5 // pred_check_branch
        %143 = sbr.rel (%p140) target = $region12
      $region11: #{fno3d_backbone_forward.9} parent=5 // pred_region
        %s144 = ssub.s32 %s10, 1
        // Predicated region
        $region13: #{fno3d_backbone_forward.9} parent=11 // pred_check
          %p145 = pneg %p31
        $region14: #{fno3d_backbone_forward.9} parent=11 // pred_check_branch
          %147 = sbr.rel (%p145) target = $region16
        $region15: #{fno3d_backbone_forward.9} parent=11 // pred_region
          _
        $region16: #{fno3d_backbone_forward.9} parent=11 // pred_fallthru
          _
        // Predicated region
        $region17: #{fno3d_backbone_forward.9} parent=11 // pred_check
          %p148 = pneg %p78
        $region18: #{fno3d_backbone_forward.9} parent=11 // pred_check_branch
          %150 = sbr.rel (%p148) target = $region20
        $region19: #{fno3d_backbone_forward.9} parent=11 // pred_region
          _
        $region20: #{fno3d_backbone_forward.9} parent=11 // pred_fallthru
          _
      $region12: #{fno3d_backbone_forward.9} parent=5 // pred_fallthru
        _
      %p151 = scmp.lt.s32.totalorder %s10, 8
      // Predicated region
      $region21: #{fno3d_backbone_forward.9} parent=5 // pred_check
        %p152 = pneg %p151
      $region22: #{fno3d_backbone_forward.9} parent=5 // pred_check_branch
        %154 = sbr.rel (%p152) target = $region24
      $region23: #{fno3d_backbone_forward.9} parent=5 // pred_region
        // Predicated region
        $region25: #{fno3d_backbone_forward.9} parent=23 // pred_check
          %p155 = pneg %p51
        $region26: #{fno3d_backbone_forward.9} parent=23 // pred_check_branch
          %157 = sbr.rel (%p155) target = $region28
        $region27: #{fno3d_backbone_forward.9} parent=23 // pred_region
          %s158 = sand.u32 %s41, 1
          %s159 = sand.u32 %s41, 1
          %s160 = smul.addr %s159, 16
          %s161 = scalar_lea.vmem [#allocation2], %s160
          %s162 = smul.addr %s10, 8
          %s163 = scalar_lea.vmem %s1, %s162
          // Predicated region
          $region29: #{fno3d_backbone_forward.9} parent=27 // pred_check
            _
          $region30: #{fno3d_backbone_forward.9} parent=27 // pred_check_branch
            %165 = sbr.rel (0) target = $region32
          $region31: #{fno3d_backbone_forward.9} parent=27 // pred_region
            // Predicated region
            $region33: #{fno3d_backbone_forward.9} parent=31 // pred_check
              _
            $region34: #{fno3d_backbone_forward.9} parent=31 // pred_check_branch
              %167 = sbr.rel (0) target = $region36
            $region35: #{fno3d_backbone_forward.9} parent=31 // pred_region
              // Predicated region
              $region48: #{fno3d_backbone_forward.9} parent=35 // pred_check
                _
              $region49: #{fno3d_backbone_forward.9} parent=35 // pred_check_branch
                %185 = sbr.rel (0) target = $region51
              $region50: #{fno3d_backbone_forward.9} parent=35 // pred_region
                loop: start=0, step=1, limit=1
                $region52: #{fno3d_backbone_forward.9} parent=50 // loop_pre_header
                  _
                $region53: #{fno3d_backbone_forward.9} parent=50 // loop_header
                  %s187 = sphi 0, %s191
                  %p188 = scmp.ge.s32.totalorder %s187, 1
                  %s192 = sphi %s163, %s163
                  %s193 = sphi %s161, %s161
                $region54: #{fno3d_backbone_forward.9} parent=50 // loop_header_branch
                  %190 = sbr.rel (%p188) target = $region58
                $region55: #{fno3d_backbone_forward.9} parent=50 // loop_body
                  %v194 = vld [vmem:[%s192] sm:$0xff]
                  %195 = vst [vmem:[%s193] sm:$0xff] %v194
                  %v196 = vld [vmem:[%s192 + $0x40] sm:$0xff]
                  %197 = vst [vmem:[%s193 + $0x8] sm:$0xff] %v196
                $region56: #{fno3d_backbone_forward.9} parent=50 // loop_footer
                  %s191 = sadd.s32 1, %s187
                $region57: #{fno3d_backbone_forward.9} parent=50 // loop_footer_branch
                  %186 = sbr.rel target = $region53
                $region58: #{fno3d_backbone_forward.9} parent=50 // loop_exit
                  _
              $region51: #{fno3d_backbone_forward.9} parent=35 // pred_fallthru
                _
              // Predicated region
              $region59: #{fno3d_backbone_forward.9} parent=35 // pred_check
                _
              $region60: #{fno3d_backbone_forward.9} parent=35 // pred_check_branch
                %199 = sbr.rel target = $region62
              $region61: #{fno3d_backbone_forward.9} parent=35 // pred_region
                _
              $region62: #{fno3d_backbone_forward.9} parent=35 // pred_fallthru
                _
            $region36: #{fno3d_backbone_forward.9} parent=31 // pred_fallthru
              _
            // Predicated region
            $region37: #{fno3d_backbone_forward.9} parent=31 // pred_check
              _
            $region38: #{fno3d_backbone_forward.9} parent=31 // pred_check_branch
              %169 = sbr.rel target = $region40
            $region39: #{fno3d_backbone_forward.9} parent=31 // pred_region
              %s171 = ssub.s32 256, 1
              loop: start=0, step=1, limit=1
              $region41: #{fno3d_backbone_forward.9} parent=39 // loop_pre_header
                _
              $region42: #{fno3d_backbone_forward.9} parent=39 // loop_header
                %s173 = sphi 0, %s177
                %p174 = scmp.ge.s32.totalorder %s173, 1
                %s178 = sphi %s163, %s163
                %s179 = sphi %s161, %s161
              $region43: #{fno3d_backbone_forward.9} parent=39 // loop_header_branch
                %176 = sbr.rel (%p174) target = $region47
              $region44: #{fno3d_backbone_forward.9} parent=39 // loop_body
                %v180 = vld [vmem:[%s178] sm:%s171]
                %181 = vst [vmem:[%s179] sm:%s171] %v180
                %v182 = vld [vmem:[%s178 + $0x40] sm:%s171]
                %183 = vst [vmem:[%s179 + $0x8] sm:%s171] %v182
              $region45: #{fno3d_backbone_forward.9} parent=39 // loop_footer
                %s177 = sadd.s32 1, %s173
              $region46: #{fno3d_backbone_forward.9} parent=39 // loop_footer_branch
                %172 = sbr.rel target = $region42
              $region47: #{fno3d_backbone_forward.9} parent=39 // loop_exit
                _
            $region40: #{fno3d_backbone_forward.9} parent=31 // pred_fallthru
              _
          $region32: #{fno3d_backbone_forward.9} parent=27 // pred_fallthru
            _
          %200 = vnop
        $region28: #{fno3d_backbone_forward.9} parent=23 // pred_fallthru
          _
        // Predicated region
        $region63: #{fno3d_backbone_forward.9} parent=23 // pred_check
          %p201 = pneg %p98
        $region64: #{fno3d_backbone_forward.9} parent=23 // pred_check_branch
          %203 = sbr.rel (%p201) target = $region66
        $region65: #{fno3d_backbone_forward.9} parent=23 // pred_region
          %s204 = sand.u32 %s88, 1
          %s205 = sand.u32 %s88, 1
          %s206 = smul.addr %s205, 16
          %s207 = scalar_lea.vmem [#allocation3], %s206
          %s208 = smul.addr %s10, 8
          %s209 = scalar_lea.vmem %s3, %s208
          // Predicated region
          $region67: #{fno3d_backbone_forward.9} parent=65 // pred_check
            _
          $region68: #{fno3d_backbone_forward.9} parent=65 // pred_check_branch
            %211 = sbr.rel (0) target = $region70
          $region69: #{fno3d_backbone_forward.9} parent=65 // pred_region
            // Predicated region
            $region71: #{fno3d_backbone_forward.9} parent=69 // pred_check
              _
            $region72: #{fno3d_backbone_forward.9} parent=69 // pred_check_branch
              %213 = sbr.rel (0) target = $region74
            $region73: #{fno3d_backbone_forward.9} parent=69 // pred_region
              // Predicated region
              $region86: #{fno3d_backbone_forward.9} parent=73 // pred_check
                _
              $region87: #{fno3d_backbone_forward.9} parent=73 // pred_check_branch
                %231 = sbr.rel (0) target = $region89
              $region88: #{fno3d_backbone_forward.9} parent=73 // pred_region
                loop: start=0, step=1, limit=1
                $region90: #{fno3d_backbone_forward.9} parent=88 // loop_pre_header
                  _
                $region91: #{fno3d_backbone_forward.9} parent=88 // loop_header
                  %s233 = sphi 0, %s237
                  %p234 = scmp.ge.s32.totalorder %s233, 1
                  %s238 = sphi %s209, %s209
                  %s239 = sphi %s207, %s207
                $region92: #{fno3d_backbone_forward.9} parent=88 // loop_header_branch
                  %236 = sbr.rel (%p234) target = $region96
                $region93: #{fno3d_backbone_forward.9} parent=88 // loop_body
                  %v240 = vld [vmem:[%s238] sm:$0xff]
                  %241 = vst [vmem:[%s239] sm:$0xff] %v240
                  %v242 = vld [vmem:[%s238 + $0x40] sm:$0xff]
                  %243 = vst [vmem:[%s239 + $0x8] sm:$0xff] %v242
                $region94: #{fno3d_backbone_forward.9} parent=88 // loop_footer
                  %s237 = sadd.s32 1, %s233
                $region95: #{fno3d_backbone_forward.9} parent=88 // loop_footer_branch
                  %232 = sbr.rel target = $region91
                $region96: #{fno3d_backbone_forward.9} parent=88 // loop_exit
                  _
              $region89: #{fno3d_backbone_forward.9} parent=73 // pred_fallthru
                _
              // Predicated region
              $region97: #{fno3d_backbone_forward.9} parent=73 // pred_check
                _
              $region98: #{fno3d_backbone_forward.9} parent=73 // pred_check_branch
                %245 = sbr.rel target = $region100
              $region99: #{fno3d_backbone_forward.9} parent=73 // pred_region
                _
              $region100: #{fno3d_backbone_forward.9} parent=73 // pred_fallthru
                _
            $region74: #{fno3d_backbone_forward.9} parent=69 // pred_fallthru
              _
            // Predicated region
            $region75: #{fno3d_backbone_forward.9} parent=69 // pred_check
              _
            $region76: #{fno3d_backbone_forward.9} parent=69 // pred_check_branch
              %215 = sbr.rel target = $region78
            $region77: #{fno3d_backbone_forward.9} parent=69 // pred_region
              %s217 = ssub.s32 256, 1
              loop: start=0, step=1, limit=1
              $region79: #{fno3d_backbone_forward.9} parent=77 // loop_pre_header
                _
              $region80: #{fno3d_backbone_forward.9} parent=77 // loop_header
                %s219 = sphi 0, %s223
                %p220 = scmp.ge.s32.totalorder %s219, 1
                %s224 = sphi %s209, %s209
                %s225 = sphi %s207, %s207
              $region81: #{fno3d_backbone_forward.9} parent=77 // loop_header_branch
                %222 = sbr.rel (%p220) target = $region85
              $region82: #{fno3d_backbone_forward.9} parent=77 // loop_body
                %v226 = vld [vmem:[%s224] sm:%s217]
                %227 = vst [vmem:[%s225] sm:%s217] %v226
                %v228 = vld [vmem:[%s224 + $0x40] sm:%s217]
                %229 = vst [vmem:[%s225 + $0x8] sm:%s217] %v228
              $region83: #{fno3d_backbone_forward.9} parent=77 // loop_footer
                %s223 = sadd.s32 1, %s219
              $region84: #{fno3d_backbone_forward.9} parent=77 // loop_footer_branch
                %218 = sbr.rel target = $region80
              $region85: #{fno3d_backbone_forward.9} parent=77 // loop_exit
                _
            $region78: #{fno3d_backbone_forward.9} parent=69 // pred_fallthru
              _
          $region70: #{fno3d_backbone_forward.9} parent=65 // pred_fallthru
            _
          %246 = vnop
        $region66: #{fno3d_backbone_forward.9} parent=23 // pred_fallthru
          _
      $region24: #{fno3d_backbone_forward.9} parent=5 // pred_fallthru
        _
      %p247 = scmp.le.s32.totalorder 1, %s10
      %p248 = scmp.lt.s32.totalorder %s10, 9
      %p249 = pnand %p247, %p248
      %p250 = pneg %p249
      // Predicated region
      $region101: #{fno3d_backbone_forward.9} parent=5 // pred_check
        _
      $region102: #{fno3d_backbone_forward.9} parent=5 // pred_check_branch
        %252 = sbr.rel (%p249) target = $region104
      $region103: #{fno3d_backbone_forward.9} parent=5 // pred_region
        %s253 = ssub.s32 %s10, 1
        %s254 = sand.u32 %s44, 1
        %s255 = sand.u32 %s44, 1
        %s256 = smul.addr %s255, 16
        %s257 = scalar_lea.vmem [#allocation2], %s256
        // Predicated region
        $region105: #{fno3d_backbone_forward.9} parent=103 // pred_check
          %p258 = pneg %p57
        $region106: #{fno3d_backbone_forward.9} parent=103 // pred_check_branch
          %260 = sbr.rel (%p258) target = $region108
        $region107: #{fno3d_backbone_forward.9} parent=103 // pred_region
          _
        $region108: #{fno3d_backbone_forward.9} parent=103 // pred_fallthru
          _
        %s261 = sand.u32 %s91, 1
        %s262 = sand.u32 %s91, 1
        %s263 = smul.addr %s262, 16
        %s264 = scalar_lea.vmem [#allocation3], %s263
        // Predicated region
        $region109: #{fno3d_backbone_forward.9} parent=103 // pred_check
          %p265 = pneg %p104
        $region110: #{fno3d_backbone_forward.9} parent=103 // pred_check_branch
          %267 = sbr.rel (%p265) target = $region112
        $region111: #{fno3d_backbone_forward.9} parent=103 // pred_region
          _
        $region112: #{fno3d_backbone_forward.9} parent=103 // pred_fallthru
          _
        %p268 = pneg %p31
        %p269 = pneg %p28
        %s270 = sand.u32 %s44, 1
        %s271 = sand.u32 %s44, 1
        %s272 = smul.addr %s271, 16
        %s273 = scalar_lea.vmem [#allocation2], %s272
        %p274 = pneg %p57
        %p275 = pneg %p54
        %p276 = pneg %p78
        %p277 = pneg %p75
        %s278 = sand.u32 %s91, 1
        %s279 = sand.u32 %s91, 1
        %s280 = smul.addr %s279, 16
        %s281 = scalar_lea.vmem [#allocation3], %s280
        %p282 = pneg %p104
        %p283 = pneg %p101
        %p284 = pneg %p130
        %p285 = pneg %p127
        %s286 = sand.u32 %s117, 1
        %s287 = sand.u32 %s117, 1
        %s288 = smul.addr %s287, 16
        %s289 = scalar_lea.vmem [#allocation4], %s288
        %v290 = vld [vmem:[%s0] sm:$0xff]
        %v291 = vld [vmem:[%s0 + $0x8] sm:$0xff]
        %v292 = vld [vmem:[%s257] sm:$0xff]
        %v293 = vld [vmem:[%s257 + $0x8] sm:$0xff]
        %v294 = vld [vmem:[%s2] sm:$0xff]
        %v295 = vld [vmem:[%s2 + $0x8] sm:$0xff]
        %297 = vset.pattern.permute.xlu0 0
        %298 = vperm.xlu0 %297, %v294
        %v299 = vpop.permute.xlu0 %298
        %302 = vset.pattern.permute.xlu0 0
        %303 = vperm.xlu0 %302, %v295
        %v304 = vpop.permute.xlu0 %303
        %vm306 = vcmask 130048
        %v308 = vsel %vm306, %v290, 0
        %v311 = vsel %vm306, %v291, 0
        %313 = vmatpush.msra.mxu0 0.0
        %314 = vmatpush.msra.mxu0 0.0
        %315 = vmatpush.msra.mxu0 0.0
        %316 = vmatpush.msra.mxu0 0.0
        %317 = vmatpush.msra.mxu0 0.0
        %318 = vmatpush.msra.mxu0 0.0
        %319 = vmatpush.msra.mxu0 0.0
        %320 = vmatpush.msra.mxu0 0.0
        %321 = vmatpush.msra.mxu0 0.0
        %322 = vmatpush.msra.mxu0 0.0
        %323 = vmatpush.msra.mxu0 0.0
        %324 = vmatpush.msra.mxu0 0.0
        %325 = vmatpush.msra.mxu0 0.0
        %326 = vmatpush.msra.mxu0 0.0
        %327 = vmatpush.msra.mxu0 %v293
        %328 = vmatpush.msra.mxu0 %v292
        %329 = vmatmul.f32.gmra.mxu0 %v308
        %v330 = vpop.f32.mrf.mxu0
        %v331 = vadd.f32 %v299, %v330
        %332 = vmatmul.f32.gmra.mxu0 %v311
        %v333 = vpop.f32.mrf.mxu0
        %v334 = vadd.f32 %v304, %v333
        %335 = vdwg.mxu0
        %v336 = vld [vmem:[%s264] sm:$0xff]
        %v337 = vld [vmem:[%s264 + $0x8] sm:$0xff]
        %v338 = vadd.f32 %v331, %v336
        %v339 = vadd.f32 %v334, %v337
        %v340 = vmul.f32 %v338, 0.5
        %v341 = vmul.f32 %v339, 0.5
        %v342 = vmul.f32 %v338, 0.044715
        %v343 = vmul.f32 %v339, 0.044715
        %v344 = vmul.f32 %v342, %v338
        %v345 = vmul.f32 %v343, %v339
        %v346 = vmul.f32 %v344, %v338
        %v347 = vmul.f32 %v345, %v339
        %v348 = vadd.f32 %v338, %v346
        %v349 = vadd.f32 %v339, %v347
        %v350 = vmul.f32 %v348, 0.7978846
        %v351 = vmul.f32 %v349, 0.7978846
        %v352 = vtanh.pop %v350
        %v353 = vtanh.pop %v351
        %v354 = vadd.f32 %v352, 1.0
        %v355 = vadd.f32 %v353, 1.0
        %v356 = vmul.f32 %v340, %v354
        %v357 = vmul.f32 %v341, %v355
        %358 = vst [vmem:[%s289] sm:$0xff] %v356
        %359 = vst [vmem:[%s289 + $0x8] sm:$0xff] %v357
        %s360 = sand.u32 %s117, 1
        %s361 = sand.u32 %s117, 1
        %s362 = smul.addr %s361, 16
        %s363 = scalar_lea.vmem [#allocation4], %s362
        // Predicated region
        $region113: #{fno3d_backbone_forward.9} parent=103 // pred_check
          %p364 = pneg %p127
        $region114: #{fno3d_backbone_forward.9} parent=103 // pred_check_branch
          %366 = sbr.rel (%p364) target = $region116
        $region115: #{fno3d_backbone_forward.9} parent=103 // pred_region
          %s367 = smul.addr %s15, 8
          %s368 = scalar_lea.vmem %s4, %s367
          // Predicated region
          $region117: #{fno3d_backbone_forward.9} parent=115 // pred_check
            _
          $region118: #{fno3d_backbone_forward.9} parent=115 // pred_check_branch
            %370 = sbr.rel (0) target = $region120
          $region119: #{fno3d_backbone_forward.9} parent=115 // pred_region
            // Predicated region
            $region121: #{fno3d_backbone_forward.9} parent=119 // pred_check
              _
            $region122: #{fno3d_backbone_forward.9} parent=119 // pred_check_branch
              %372 = sbr.rel (0) target = $region124
            $region123: #{fno3d_backbone_forward.9} parent=119 // pred_region
              // Predicated region
              $region136: #{fno3d_backbone_forward.9} parent=123 // pred_check
                _
              $region137: #{fno3d_backbone_forward.9} parent=123 // pred_check_branch
                %390 = sbr.rel (0) target = $region139
              $region138: #{fno3d_backbone_forward.9} parent=123 // pred_region
                loop: start=0, step=1, limit=1
                $region140: #{fno3d_backbone_forward.9} parent=138 // loop_pre_header
                  _
                $region141: #{fno3d_backbone_forward.9} parent=138 // loop_header
                  %s392 = sphi 0, %s396
                  %p393 = scmp.ge.s32.totalorder %s392, 1
                  %s397 = sphi %s363, %s363
                  %s398 = sphi %s368, %s368
                $region142: #{fno3d_backbone_forward.9} parent=138 // loop_header_branch
                  %395 = sbr.rel (%p393) target = $region146
                $region143: #{fno3d_backbone_forward.9} parent=138 // loop_body
                  %v399 = vld [vmem:[%s397] sm:$0xff]
                  %400 = vst [vmem:[%s398] sm:$0xff] %v399
                  %v401 = vld [vmem:[%s397 + $0x8] sm:$0xff]
                  %402 = vst [vmem:[%s398 + $0x40] sm:$0xff] %v401
                $region144: #{fno3d_backbone_forward.9} parent=138 // loop_footer
                  %s396 = sadd.s32 1, %s392
                $region145: #{fno3d_backbone_forward.9} parent=138 // loop_footer_branch
                  %391 = sbr.rel target = $region141
                $region146: #{fno3d_backbone_forward.9} parent=138 // loop_exit
                  _
              $region139: #{fno3d_backbone_forward.9} parent=123 // pred_fallthru
                _
              // Predicated region
              $region147: #{fno3d_backbone_forward.9} parent=123 // pred_check
                _
              $region148: #{fno3d_backbone_forward.9} parent=123 // pred_check_branch
                %404 = sbr.rel target = $region150
              $region149: #{fno3d_backbone_forward.9} parent=123 // pred_region
                _
              $region150: #{fno3d_backbone_forward.9} parent=123 // pred_fallthru
                _
            $region124: #{fno3d_backbone_forward.9} parent=119 // pred_fallthru
              _
            // Predicated region
            $region125: #{fno3d_backbone_forward.9} parent=119 // pred_check
              _
            $region126: #{fno3d_backbone_forward.9} parent=119 // pred_check_branch
              %374 = sbr.rel target = $region128
            $region127: #{fno3d_backbone_forward.9} parent=119 // pred_region
              %s376 = ssub.s32 256, 1
              loop: start=0, step=1, limit=1
              $region129: #{fno3d_backbone_forward.9} parent=127 // loop_pre_header
                _
              $region130: #{fno3d_backbone_forward.9} parent=127 // loop_header
                %s378 = sphi 0, %s382
                %p379 = scmp.ge.s32.totalorder %s378, 1
                %s383 = sphi %s363, %s363
                %s384 = sphi %s368, %s368
              $region131: #{fno3d_backbone_forward.9} parent=127 // loop_header_branch
                %381 = sbr.rel (%p379) target = $region135
              $region132: #{fno3d_backbone_forward.9} parent=127 // loop_body
                %v385 = vld [vmem:[%s383] sm:%s376]
                %386 = vst [vmem:[%s384] sm:%s376] %v385
                %v387 = vld [vmem:[%s383 + $0x8] sm:%s376]
                %388 = vst [vmem:[%s384 + $0x40] sm:%s376] %v387
              $region133: #{fno3d_backbone_forward.9} parent=127 // loop_footer
                %s382 = sadd.s32 1, %s378
              $region134: #{fno3d_backbone_forward.9} parent=127 // loop_footer_branch
                %377 = sbr.rel target = $region130
              $region135: #{fno3d_backbone_forward.9} parent=127 // loop_exit
                _
            $region128: #{fno3d_backbone_forward.9} parent=119 // pred_fallthru
              _
          $region120: #{fno3d_backbone_forward.9} parent=115 // pred_fallthru
            _
          %405 = vnop
        $region116: #{fno3d_backbone_forward.9} parent=103 // pred_fallthru
          _
      $region104: #{fno3d_backbone_forward.9} parent=5 // pred_fallthru
        _
      %p406 = scmp.le.s32.totalorder 2, %s10
      // Predicated region
      $region151: #{fno3d_backbone_forward.9} parent=5 // pred_check
        %p407 = pneg %p406
      $region152: #{fno3d_backbone_forward.9} parent=5 // pred_check_branch
        %409 = sbr.rel (%p407) target = $region154
      $region153: #{fno3d_backbone_forward.9} parent=5 // pred_region
        %s410 = ssub.s32 %s10, 2
        // Predicated region
        $region155: #{fno3d_backbone_forward.9} parent=153 // pred_check
          %p411 = pneg %p133
        $region156: #{fno3d_backbone_forward.9} parent=153 // pred_check_branch
          %413 = sbr.rel (%p411) target = $region158
        $region157: #{fno3d_backbone_forward.9} parent=153 // pred_region
          %s414 = sand.u32 %s118, 1
          %s415 = sand.u32 %s118, 1
          %s416 = smul.addr %s415, 16
          %s417 = scalar_lea.vmem [#allocation4], %s416
        $region158: #{fno3d_backbone_forward.9} parent=153 // pred_fallthru
          _
      $region154: #{fno3d_backbone_forward.9} parent=5 // pred_fallthru
        _
    $region6: #{fno3d_backbone_forward.9} parent=1 // loop_footer
      %s14 = sadd.s32 1, %s10
    $region7: #{fno3d_backbone_forward.9} parent=1 // loop_footer_branch
      %9 = sbr.rel target = $region3
    $region8: #{fno3d_backbone_forward.9} parent=1 // loop_exit
      _

// kernel: fno3d_backbone_forward.13
$region0: #{fno3d_backbone_forward.13}
  #allocation0 [shape = 'u32[]', space=smem, size = 0x4, offset = 0x4, fixed_abs, tag = 'smem constant byte address 0x4 - core index']
  #allocation1 [shape = 'u32[72,128]{1,0:T(1,128)}', space=vmem, size = 0x9000, scoped, tag = 'internal scratch']
  %s0 = inlined_call_operand.vmem [shape: f32[16,16], index: 0, kind: input, shape index: {}]
  %s1 = inlined_call_operand.vmem [shape: f32[16,1024], index: 1, kind: input, shape index: {}]
  %s2 = inlined_call_operand.vmem [shape: f32[16,1], index: 2, kind: input, shape index: {}]
  %s3 = inlined_call_operand.vmem [shape: f32[16,1024], index: 3, kind: input, shape index: {}]
  %s4 = inlined_call_operand.vmem [shape: f32[16,1024], index: 4, kind: output, shape index: {}]
  %s5 = sld [smem:[#allocation0]]
  $region159: #{fno3d_backbone_forward.13} parent=0
    _
  %s7 = ssub.s32 1, %s5
  %s8 = scalar_select 0, %s7, %s5
  $region1: #{fno3d_backbone_forward.13} parent=0
    #allocation2 [shape = 'u8[16384]{0}', space=vmem, size = 0x4000, scoped, tag = 'input window, operand 1']
    #allocation3 [shape = 'u8[16384]{0}', space=vmem, size = 0x4000, scoped, tag = 'input window, operand 3']
    #allocation4 [shape = 'u8[16384]{0}', space=vmem, size = 0x4000, scoped, tag = 'output window, operand 0']
    loop: start=0, step=1, limit=10
    $region2: #{fno3d_backbone_forward.13} parent=1 // loop_pre_header
      _
    $region3: #{fno3d_backbone_forward.13} parent=1 // loop_header
      %s10 = sphi 0, %s14
      %p11 = scmp.ge.s32.totalorder %s10, 10
      %s18 = sphi 0, %s18
      %s20 = sphi 0, %s18
      %s21 = sphi 0, %s20
      %s35 = sphi 0, %s21
      %s41 = sphi 0, %s43
      %s44 = sphi 0, %s41
      %s45 = sphi 0, %s44
      %s61 = sphi 0, %s45
      %s65 = sphi 0, %s65
      %s67 = sphi 0, %s65
      %s68 = sphi 0, %s67
      %s82 = sphi 0, %s68
      %s88 = sphi 0, %s90
      %s91 = sphi 0, %s88
      %s92 = sphi 0, %s91
      %s108 = sphi 0, %s92
      %s114 = sphi 0, %s116
      %s117 = sphi 0, %s114
      %s118 = sphi 0, %s117
      %s134 = sphi 0, %s118
    $region4: #{fno3d_backbone_forward.13} parent=1 // loop_header_branch
      %13 = sbr.rel (%p11) target = $region8
    $region5: #{fno3d_backbone_forward.13} parent=1 // loop_body
      %s15 = ssub.s32 %s10, 1
      %s16 = ssub.s32 %s10, 2
      %s17 = sadd.s32 %s10, 1
      %s19 = sadd.s32 %s18, 1
      %p22 = scmp.eq.s32.totalorder %s10, 7
      %p23 = scmp.ne.s32.totalorder %s18, %s20
      %p24 = scmp.eq.s32.totalorder %s10, 0
      %p25 = por %p23, %p24
      %p26 = scmp.ne.s32.totalorder %s18, %s20
      %p27 = scmp.eq.s32.totalorder %s15, 7
      %p28 = por %p26, %p27
      %p29 = scmp.ne.s32.totalorder %s20, %s21
      %p30 = scmp.eq.s32.totalorder %s15, 0
      %p31 = por %p29, %p30
      %p32 = scmp.ne.s32.totalorder %s20, %s21
      %p33 = scmp.eq.s32.totalorder %s16, 7
      %p34 = por %p32, %p33
      %p36 = scmp.ne.s32.totalorder %s21, %s35
      %p37 = scmp.eq.s32.totalorder %s16, 0
      %p38 = por %p36, %p37
      %s39 = ssub.s32 %s10, %s17
      %p40 = scmp.eq.s32.totalorder %s39, 0
      %s42 = sadd.s32 %s41, 1
      %s43 = scalar_select %p40, %s41, %s42
      %p46 = pneg %p40
      %p47 = scmp.eq.s32.totalorder %s10, 7
      %p48 = por %p46, %p47
      %p49 = scmp.ne.s32.totalorder %s41, %s44
      %p50 = scmp.eq.s32.totalorder %s10, 0
      %p51 = por %p49, %p50
      %p52 = scmp.ne.s32.totalorder %s41, %s44
      %p53 = scmp.eq.s32.totalorder %s15, 7
      %p54 = por %p52, %p53
      %p55 = scmp.ne.s32.totalorder %s44, %s45
      %p56 = scmp.eq.s32.totalorder %s15, 0
      %p57 = por %p55, %p56
      %p58 = scmp.ne.s32.totalorder %s44, %s45
      %p59 = scmp.eq.s32.totalorder %s16, 7
      %p60 = por %p58, %p59
      %p62 = scmp.ne.s32.totalorder %s45, %s61
      %p63 = scmp.eq.s32.totalorder %s16, 0
      %p64 = por %p62, %p63
      %s66 = sadd.s32 %s65, 1
      %p69 = scmp.eq.s32.totalorder %s10, 7
      %p70 = scmp.ne.s32.totalorder %s65, %s67
      %p71 = scmp.eq.s32.totalorder %s10, 0
      %p72 = por %p70, %p71
      %p73 = scmp.ne.s32.totalorder %s65, %s67
      %p74 = scmp.eq.s32.totalorder %s15, 7
      %p75 = por %p73, %p74
      %p76 = scmp.ne.s32.totalorder %s67, %s68
      %p77 = scmp.eq.s32.totalorder %s15, 0
      %p78 = por %p76, %p77
      %p79 = scmp.ne.s32.totalorder %s67, %s68
      %p80 = scmp.eq.s32.totalorder %s16, 7
      %p81 = por %p79, %p80
      %p83 = scmp.ne.s32.totalorder %s68, %s82
      %p84 = scmp.eq.s32.totalorder %s16, 0
      %p85 = por %p83, %p84
      %s86 = ssub.s32 %s10, %s17
      %p87 = scmp.eq.s32.totalorder %s86, 0
      %s89 = sadd.s32 %s88, 1
      %s90 = scalar_select %p87, %s88, %s89
      %p93 = pneg %p87
      %p94 = scmp.eq.s32.totalorder %s10, 7
      %p95 = por %p93, %p94
      %p96 = scmp.ne.s32.totalorder %s88, %s91
      %p97 = scmp.eq.s32.totalorder %s10, 0
      %p98 = por %p96, %p97
      %p99 = scmp.ne.s32.totalorder %s88, %s91
      %p100 = scmp.eq.s32.totalorder %s15, 7
      %p101 = por %p99, %p100
      %p102 = scmp.ne.s32.totalorder %s91, %s92
      %p103 = scmp.eq.s32.totalorder %s15, 0
      %p104 = por %p102, %p103
      %p105 = scmp.ne.s32.totalorder %s91, %s92
      %p106 = scmp.eq.s32.totalorder %s16, 7
      %p107 = por %p105, %p106
      %p109 = scmp.ne.s32.totalorder %s92, %s108
      %p110 = scmp.eq.s32.totalorder %s16, 0
      %p111 = por %p109, %p110
      %s112 = ssub.s32 %s10, %s17
      %p113 = scmp.eq.s32.totalorder %s112, 0
      %s115 = sadd.s32 %s114, 1
      %s116 = scalar_select %p113, %s114, %s115
      %p119 = pneg %p113
      %p120 = scmp.eq.s32.totalorder %s10, 7
      %p121 = por %p119, %p120
      %p122 = scmp.ne.s32.totalorder %s114, %s117
      %p123 = scmp.eq.s32.totalorder %s10, 0
      %p124 = por %p122, %p123
      %p125 = scmp.ne.s32.totalorder %s114, %s117
      %p126 = scmp.eq.s32.totalorder %s15, 7
      %p127 = por %p125, %p126
      %p128 = scmp.ne.s32.totalorder %s117, %s118
      %p129 = scmp.eq.s32.totalorder %s15, 0
      %p130 = por %p128, %p129
      %p131 = scmp.ne.s32.totalorder %s117, %s118
      %p132 = scmp.eq.s32.totalorder %s16, 7
      %p133 = por %p131, %p132
      %p135 = scmp.ne.s32.totalorder %s118, %s134
      %p136 = scmp.eq.s32.totalorder %s16, 0
      %p137 = por %p135, %p136
      %p138 = scmp.le.s32.totalorder 1, %s10
      %p139 = scmp.lt.s32.totalorder %s10, 9
      %p140 = pnand %p138, %p139
      %p141 = pneg %p140
      // Predicated region
      $region9: #{fno3d_backbone_forward.13} parent=5 // pred_check
        _
      $region10: #{fno3d_backbone_forward.13} parent=5 // pred_check_branch
        %143 = sbr.rel (%p140) target = $region12
      $region11: #{fno3d_backbone_forward.13} parent=5 // pred_region
        %s144 = ssub.s32 %s10, 1
        // Predicated region
        $region13: #{fno3d_backbone_forward.13} parent=11 // pred_check
          %p145 = pneg %p31
        $region14: #{fno3d_backbone_forward.13} parent=11 // pred_check_branch
          %147 = sbr.rel (%p145) target = $region16
        $region15: #{fno3d_backbone_forward.13} parent=11 // pred_region
          _
        $region16: #{fno3d_backbone_forward.13} parent=11 // pred_fallthru
          _
        // Predicated region
        $region17: #{fno3d_backbone_forward.13} parent=11 // pred_check
          %p148 = pneg %p78
        $region18: #{fno3d_backbone_forward.13} parent=11 // pred_check_branch
          %150 = sbr.rel (%p148) target = $region20
        $region19: #{fno3d_backbone_forward.13} parent=11 // pred_region
          _
        $region20: #{fno3d_backbone_forward.13} parent=11 // pred_fallthru
          _
      $region12: #{fno3d_backbone_forward.13} parent=5 // pred_fallthru
        _
      %p151 = scmp.lt.s32.totalorder %s10, 8
      // Predicated region
      $region21: #{fno3d_backbone_forward.13} parent=5 // pred_check
        %p152 = pneg %p151
      $region22: #{fno3d_backbone_forward.13} parent=5 // pred_check_branch
        %154 = sbr.rel (%p152) target = $region24
      $region23: #{fno3d_backbone_forward.13} parent=5 // pred_region
        // Predicated region
        $region25: #{fno3d_backbone_forward.13} parent=23 // pred_check
          %p155 = pneg %p51
        $region26: #{fno3d_backbone_forward.13} parent=23 // pred_check_branch
          %157 = sbr.rel (%p155) target = $region28
        $region27: #{fno3d_backbone_forward.13} parent=23 // pred_region
          %s158 = sand.u32 %s41, 1
          %s159 = sand.u32 %s41, 1
          %s160 = smul.addr %s159, 16
          %s161 = scalar_lea.vmem [#allocation2], %s160
          %s162 = smul.addr %s10, 8
          %s163 = scalar_lea.vmem %s1, %s162
          // Predicated region
          $region29: #{fno3d_backbone_forward.13} parent=27 // pred_check
            _
          $region30: #{fno3d_backbone_forward.13} parent=27 // pred_check_branch
            %165 = sbr.rel (0) target = $region32
          $region31: #{fno3d_backbone_forward.13} parent=27 // pred_region
            // Predicated region
            $region33: #{fno3d_backbone_forward.13} parent=31 // pred_check
              _
            $region34: #{fno3d_backbone_forward.13} parent=31 // pred_check_branch
              %167 = sbr.rel (0) target = $region36
            $region35: #{fno3d_backbone_forward.13} parent=31 // pred_region
              // Predicated region
              $region48: #{fno3d_backbone_forward.13} parent=35 // pred_check
                _
              $region49: #{fno3d_backbone_forward.13} parent=35 // pred_check_branch
                %185 = sbr.rel (0) target = $region51
              $region50: #{fno3d_backbone_forward.13} parent=35 // pred_region
                loop: start=0, step=1, limit=1
                $region52: #{fno3d_backbone_forward.13} parent=50 // loop_pre_header
                  _
                $region53: #{fno3d_backbone_forward.13} parent=50 // loop_header
                  %s187 = sphi 0, %s191
                  %p188 = scmp.ge.s32.totalorder %s187, 1
                  %s192 = sphi %s163, %s163
                  %s193 = sphi %s161, %s161
                $region54: #{fno3d_backbone_forward.13} parent=50 // loop_header_branch
                  %190 = sbr.rel (%p188) target = $region58
                $region55: #{fno3d_backbone_forward.13} parent=50 // loop_body
                  %v194 = vld [vmem:[%s192] sm:$0xff]
                  %195 = vst [vmem:[%s193] sm:$0xff] %v194
                  %v196 = vld [vmem:[%s192 + $0x40] sm:$0xff]
                  %197 = vst [vmem:[%s193 + $0x8] sm:$0xff] %v196
                $region56: #{fno3d_backbone_forward.13} parent=50 // loop_footer
                  %s191 = sadd.s32 1, %s187
                $region57: #{fno3d_backbone_forward.13} parent=50 // loop_footer_branch
                  %186 = sbr.rel target = $region53
                $region58: #{fno3d_backbone_forward.13} parent=50 // loop_exit
                  _
              $region51: #{fno3d_backbone_forward.13} parent=35 // pred_fallthru
                _
              // Predicated region
              $region59: #{fno3d_backbone_forward.13} parent=35 // pred_check
                _
              $region60: #{fno3d_backbone_forward.13} parent=35 // pred_check_branch
                %199 = sbr.rel target = $region62
              $region61: #{fno3d_backbone_forward.13} parent=35 // pred_region
                _
              $region62: #{fno3d_backbone_forward.13} parent=35 // pred_fallthru
                _
            $region36: #{fno3d_backbone_forward.13} parent=31 // pred_fallthru
              _
            // Predicated region
            $region37: #{fno3d_backbone_forward.13} parent=31 // pred_check
              _
            $region38: #{fno3d_backbone_forward.13} parent=31 // pred_check_branch
              %169 = sbr.rel target = $region40
            $region39: #{fno3d_backbone_forward.13} parent=31 // pred_region
              %s171 = ssub.s32 256, 1
              loop: start=0, step=1, limit=1
              $region41: #{fno3d_backbone_forward.13} parent=39 // loop_pre_header
                _
              $region42: #{fno3d_backbone_forward.13} parent=39 // loop_header
                %s173 = sphi 0, %s177
                %p174 = scmp.ge.s32.totalorder %s173, 1
                %s178 = sphi %s163, %s163
                %s179 = sphi %s161, %s161
              $region43: #{fno3d_backbone_forward.13} parent=39 // loop_header_branch
                %176 = sbr.rel (%p174) target = $region47
              $region44: #{fno3d_backbone_forward.13} parent=39 // loop_body
                %v180 = vld [vmem:[%s178] sm:%s171]
                %181 = vst [vmem:[%s179] sm:%s171] %v180
                %v182 = vld [vmem:[%s178 + $0x40] sm:%s171]
                %183 = vst [vmem:[%s179 + $0x8] sm:%s171] %v182
              $region45: #{fno3d_backbone_forward.13} parent=39 // loop_footer
                %s177 = sadd.s32 1, %s173
              $region46: #{fno3d_backbone_forward.13} parent=39 // loop_footer_branch
                %172 = sbr.rel target = $region42
              $region47: #{fno3d_backbone_forward.13} parent=39 // loop_exit
                _
            $region40: #{fno3d_backbone_forward.13} parent=31 // pred_fallthru
              _
          $region32: #{fno3d_backbone_forward.13} parent=27 // pred_fallthru
            _
          %200 = vnop
        $region28: #{fno3d_backbone_forward.13} parent=23 // pred_fallthru
          _
        // Predicated region
        $region63: #{fno3d_backbone_forward.13} parent=23 // pred_check
          %p201 = pneg %p98
        $region64: #{fno3d_backbone_forward.13} parent=23 // pred_check_branch
          %203 = sbr.rel (%p201) target = $region66
        $region65: #{fno3d_backbone_forward.13} parent=23 // pred_region
          %s204 = sand.u32 %s88, 1
          %s205 = sand.u32 %s88, 1
          %s206 = smul.addr %s205, 16
          %s207 = scalar_lea.vmem [#allocation3], %s206
          %s208 = smul.addr %s10, 8
          %s209 = scalar_lea.vmem %s3, %s208
          // Predicated region
          $region67: #{fno3d_backbone_forward.13} parent=65 // pred_check
            _
          $region68: #{fno3d_backbone_forward.13} parent=65 // pred_check_branch
            %211 = sbr.rel (0) target = $region70
          $region69: #{fno3d_backbone_forward.13} parent=65 // pred_region
            // Predicated region
            $region71: #{fno3d_backbone_forward.13} parent=69 // pred_check
              _
            $region72: #{fno3d_backbone_forward.13} parent=69 // pred_check_branch
              %213 = sbr.rel (0) target = $region74
            $region73: #{fno3d_backbone_forward.13} parent=69 // pred_region
              // Predicated region
              $region86: #{fno3d_backbone_forward.13} parent=73 // pred_check
                _
              $region87: #{fno3d_backbone_forward.13} parent=73 // pred_check_branch
                %231 = sbr.rel (0) target = $region89
              $region88: #{fno3d_backbone_forward.13} parent=73 // pred_region
                loop: start=0, step=1, limit=1
                $region90: #{fno3d_backbone_forward.13} parent=88 // loop_pre_header
                  _
                $region91: #{fno3d_backbone_forward.13} parent=88 // loop_header
                  %s233 = sphi 0, %s237
                  %p234 = scmp.ge.s32.totalorder %s233, 1
                  %s238 = sphi %s209, %s209
                  %s239 = sphi %s207, %s207
                $region92: #{fno3d_backbone_forward.13} parent=88 // loop_header_branch
                  %236 = sbr.rel (%p234) target = $region96
                $region93: #{fno3d_backbone_forward.13} parent=88 // loop_body
                  %v240 = vld [vmem:[%s238] sm:$0xff]
                  %241 = vst [vmem:[%s239] sm:$0xff] %v240
                  %v242 = vld [vmem:[%s238 + $0x40] sm:$0xff]
                  %243 = vst [vmem:[%s239 + $0x8] sm:$0xff] %v242
                $region94: #{fno3d_backbone_forward.13} parent=88 // loop_footer
                  %s237 = sadd.s32 1, %s233
                $region95: #{fno3d_backbone_forward.13} parent=88 // loop_footer_branch
                  %232 = sbr.rel target = $region91
                $region96: #{fno3d_backbone_forward.13} parent=88 // loop_exit
                  _
              $region89: #{fno3d_backbone_forward.13} parent=73 // pred_fallthru
                _
              // Predicated region
              $region97: #{fno3d_backbone_forward.13} parent=73 // pred_check
                _
              $region98: #{fno3d_backbone_forward.13} parent=73 // pred_check_branch
                %245 = sbr.rel target = $region100
              $region99: #{fno3d_backbone_forward.13} parent=73 // pred_region
                _
              $region100: #{fno3d_backbone_forward.13} parent=73 // pred_fallthru
                _
            $region74: #{fno3d_backbone_forward.13} parent=69 // pred_fallthru
              _
            // Predicated region
            $region75: #{fno3d_backbone_forward.13} parent=69 // pred_check
              _
            $region76: #{fno3d_backbone_forward.13} parent=69 // pred_check_branch
              %215 = sbr.rel target = $region78
            $region77: #{fno3d_backbone_forward.13} parent=69 // pred_region
              %s217 = ssub.s32 256, 1
              loop: start=0, step=1, limit=1
              $region79: #{fno3d_backbone_forward.13} parent=77 // loop_pre_header
                _
              $region80: #{fno3d_backbone_forward.13} parent=77 // loop_header
                %s219 = sphi 0, %s223
                %p220 = scmp.ge.s32.totalorder %s219, 1
                %s224 = sphi %s209, %s209
                %s225 = sphi %s207, %s207
              $region81: #{fno3d_backbone_forward.13} parent=77 // loop_header_branch
                %222 = sbr.rel (%p220) target = $region85
              $region82: #{fno3d_backbone_forward.13} parent=77 // loop_body
                %v226 = vld [vmem:[%s224] sm:%s217]
                %227 = vst [vmem:[%s225] sm:%s217] %v226
                %v228 = vld [vmem:[%s224 + $0x40] sm:%s217]
                %229 = vst [vmem:[%s225 + $0x8] sm:%s217] %v228
              $region83: #{fno3d_backbone_forward.13} parent=77 // loop_footer
                %s223 = sadd.s32 1, %s219
              $region84: #{fno3d_backbone_forward.13} parent=77 // loop_footer_branch
                %218 = sbr.rel target = $region80
              $region85: #{fno3d_backbone_forward.13} parent=77 // loop_exit
                _
            $region78: #{fno3d_backbone_forward.13} parent=69 // pred_fallthru
              _
          $region70: #{fno3d_backbone_forward.13} parent=65 // pred_fallthru
            _
          %246 = vnop
        $region66: #{fno3d_backbone_forward.13} parent=23 // pred_fallthru
          _
      $region24: #{fno3d_backbone_forward.13} parent=5 // pred_fallthru
        _
      %p247 = scmp.le.s32.totalorder 1, %s10
      %p248 = scmp.lt.s32.totalorder %s10, 9
      %p249 = pnand %p247, %p248
      %p250 = pneg %p249
      // Predicated region
      $region101: #{fno3d_backbone_forward.13} parent=5 // pred_check
        _
      $region102: #{fno3d_backbone_forward.13} parent=5 // pred_check_branch
        %252 = sbr.rel (%p249) target = $region104
      $region103: #{fno3d_backbone_forward.13} parent=5 // pred_region
        %s253 = ssub.s32 %s10, 1
        %s254 = sand.u32 %s44, 1
        %s255 = sand.u32 %s44, 1
        %s256 = smul.addr %s255, 16
        %s257 = scalar_lea.vmem [#allocation2], %s256
        // Predicated region
        $region105: #{fno3d_backbone_forward.13} parent=103 // pred_check
          %p258 = pneg %p57
        $region106: #{fno3d_backbone_forward.13} parent=103 // pred_check_branch
          %260 = sbr.rel (%p258) target = $region108
        $region107: #{fno3d_backbone_forward.13} parent=103 // pred_region
          _
        $region108: #{fno3d_backbone_forward.13} parent=103 // pred_fallthru
          _
        %s261 = sand.u32 %s91, 1
        %s262 = sand.u32 %s91, 1
        %s263 = smul.addr %s262, 16
        %s264 = scalar_lea.vmem [#allocation3], %s263
        // Predicated region
        $region109: #{fno3d_backbone_forward.13} parent=103 // pred_check
          %p265 = pneg %p104
        $region110: #{fno3d_backbone_forward.13} parent=103 // pred_check_branch
          %267 = sbr.rel (%p265) target = $region112
        $region111: #{fno3d_backbone_forward.13} parent=103 // pred_region
          _
        $region112: #{fno3d_backbone_forward.13} parent=103 // pred_fallthru
          _
        %p268 = pneg %p31
        %p269 = pneg %p28
        %s270 = sand.u32 %s44, 1
        %s271 = sand.u32 %s44, 1
        %s272 = smul.addr %s271, 16
        %s273 = scalar_lea.vmem [#allocation2], %s272
        %p274 = pneg %p57
        %p275 = pneg %p54
        %p276 = pneg %p78
        %p277 = pneg %p75
        %s278 = sand.u32 %s91, 1
        %s279 = sand.u32 %s91, 1
        %s280 = smul.addr %s279, 16
        %s281 = scalar_lea.vmem [#allocation3], %s280
        %p282 = pneg %p104
        %p283 = pneg %p101
        %p284 = pneg %p130
        %p285 = pneg %p127
        %s286 = sand.u32 %s117, 1
        %s287 = sand.u32 %s117, 1
        %s288 = smul.addr %s287, 16
        %s289 = scalar_lea.vmem [#allocation4], %s288
        %v290 = vld [vmem:[%s0] sm:$0xff]
        %v291 = vld [vmem:[%s0 + $0x8] sm:$0xff]
        %v292 = vld [vmem:[%s257] sm:$0xff]
        %v293 = vld [vmem:[%s257 + $0x8] sm:$0xff]
        %v294 = vld [vmem:[%s2] sm:$0xff]
        %v295 = vld [vmem:[%s2 + $0x8] sm:$0xff]
        %297 = vset.pattern.permute.xlu0 0
        %298 = vperm.xlu0 %297, %v294
        %v299 = vpop.permute.xlu0 %298
        %302 = vset.pattern.permute.xlu0 0
        %303 = vperm.xlu0 %302, %v295
        %v304 = vpop.permute.xlu0 %303
        %vm306 = vcmask 130048
        %v308 = vsel %vm306, %v290, 0
        %v311 = vsel %vm306, %v291, 0
        %313 = vmatpush.msra.mxu0 0.0
        %314 = vmatpush.msra.mxu0 0.0
        %315 = vmatpush.msra.mxu0 0.0
        %316 = vmatpush.msra.mxu0 0.0
        %317 = vmatpush.msra.mxu0 0.0
        %318 = vmatpush.msra.mxu0 0.0
        %319 = vmatpush.msra.mxu0 0.0
        %320 = vmatpush.msra.mxu0 0.0
        %321 = vmatpush.msra.mxu0 0.0
        %322 = vmatpush.msra.mxu0 0.0
        %323 = vmatpush.msra.mxu0 0.0
        %324 = vmatpush.msra.mxu0 0.0
        %325 = vmatpush.msra.mxu0 0.0
        %326 = vmatpush.msra.mxu0 0.0
        %327 = vmatpush.msra.mxu0 %v293
        %328 = vmatpush.msra.mxu0 %v292
        %329 = vmatmul.f32.gmra.mxu0 %v308
        %v330 = vpop.f32.mrf.mxu0
        %v331 = vadd.f32 %v299, %v330
        %332 = vmatmul.f32.gmra.mxu0 %v311
        %v333 = vpop.f32.mrf.mxu0
        %v334 = vadd.f32 %v304, %v333
        %335 = vdwg.mxu0
        %v336 = vld [vmem:[%s264] sm:$0xff]
        %v337 = vld [vmem:[%s264 + $0x8] sm:$0xff]
        %v338 = vadd.f32 %v331, %v336
        %v339 = vadd.f32 %v334, %v337
        %340 = vst [vmem:[%s289] sm:$0xff] %v338
        %341 = vst [vmem:[%s289 + $0x8] sm:$0xff] %v339
        %s342 = sand.u32 %s117, 1
        %s343 = sand.u32 %s117, 1
        %s344 = smul.addr %s343, 16
        %s345 = scalar_lea.vmem [#allocation4], %s344
        // Predicated region
        $region113: #{fno3d_backbone_forward.13} parent=103 // pred_check
          %p346 = pneg %p127
        $region114: #{fno3d_backbone_forward.13} parent=103 // pred_check_branch
          %348 = sbr.rel (%p346) target = $region116
        $region115: #{fno3d_backbone_forward.13} parent=103 // pred_region
          %s349 = smul.addr %s15, 8
          %s350 = scalar_lea.vmem %s4, %s349
          // Predicated region
          $region117: #{fno3d_backbone_forward.13} parent=115 // pred_check
            _
          $region118: #{fno3d_backbone_forward.13} parent=115 // pred_check_branch
            %352 = sbr.rel (0) target = $region120
          $region119: #{fno3d_backbone_forward.13} parent=115 // pred_region
            // Predicated region
            $region121: #{fno3d_backbone_forward.13} parent=119 // pred_check
              _
            $region122: #{fno3d_backbone_forward.13} parent=119 // pred_check_branch
              %354 = sbr.rel (0) target = $region124
            $region123: #{fno3d_backbone_forward.13} parent=119 // pred_region
              // Predicated region
              $region136: #{fno3d_backbone_forward.13} parent=123 // pred_check
                _
              $region137: #{fno3d_backbone_forward.13} parent=123 // pred_check_branch
                %372 = sbr.rel (0) target = $region139
              $region138: #{fno3d_backbone_forward.13} parent=123 // pred_region
                loop: start=0, step=1, limit=1
                $region140: #{fno3d_backbone_forward.13} parent=138 // loop_pre_header
                  _
                $region141: #{fno3d_backbone_forward.13} parent=138 // loop_header
                  %s374 = sphi 0, %s378
                  %p375 = scmp.ge.s32.totalorder %s374, 1
                  %s379 = sphi %s345, %s345
                  %s380 = sphi %s350, %s350
                $region142: #{fno3d_backbone_forward.13} parent=138 // loop_header_branch
                  %377 = sbr.rel (%p375) target = $region146
                $region143: #{fno3d_backbone_forward.13} parent=138 // loop_body
                  %v381 = vld [vmem:[%s379] sm:$0xff]
                  %382 = vst [vmem:[%s380] sm:$0xff] %v381
                  %v383 = vld [vmem:[%s379 + $0x8] sm:$0xff]
                  %384 = vst [vmem:[%s380 + $0x40] sm:$0xff] %v383
                $region144: #{fno3d_backbone_forward.13} parent=138 // loop_footer
                  %s378 = sadd.s32 1, %s374
                $region145: #{fno3d_backbone_forward.13} parent=138 // loop_footer_branch
                  %373 = sbr.rel target = $region141
                $region146: #{fno3d_backbone_forward.13} parent=138 // loop_exit
                  _
              $region139: #{fno3d_backbone_forward.13} parent=123 // pred_fallthru
                _
              // Predicated region
              $region147: #{fno3d_backbone_forward.13} parent=123 // pred_check
                _
              $region148: #{fno3d_backbone_forward.13} parent=123 // pred_check_branch
                %386 = sbr.rel target = $region150
              $region149: #{fno3d_backbone_forward.13} parent=123 // pred_region
                _
              $region150: #{fno3d_backbone_forward.13} parent=123 // pred_fallthru
                _
            $region124: #{fno3d_backbone_forward.13} parent=119 // pred_fallthru
              _
            // Predicated region
            $region125: #{fno3d_backbone_forward.13} parent=119 // pred_check
              _
            $region126: #{fno3d_backbone_forward.13} parent=119 // pred_check_branch
              %356 = sbr.rel target = $region128
            $region127: #{fno3d_backbone_forward.13} parent=119 // pred_region
              %s358 = ssub.s32 256, 1
              loop: start=0, step=1, limit=1
              $region129: #{fno3d_backbone_forward.13} parent=127 // loop_pre_header
                _
              $region130: #{fno3d_backbone_forward.13} parent=127 // loop_header
                %s360 = sphi 0, %s364
                %p361 = scmp.ge.s32.totalorder %s360, 1
                %s365 = sphi %s345, %s345
                %s366 = sphi %s350, %s350
              $region131: #{fno3d_backbone_forward.13} parent=127 // loop_header_branch
                %363 = sbr.rel (%p361) target = $region135
              $region132: #{fno3d_backbone_forward.13} parent=127 // loop_body
                %v367 = vld [vmem:[%s365] sm:%s358]
                %368 = vst [vmem:[%s366] sm:%s358] %v367
                %v369 = vld [vmem:[%s365 + $0x8] sm:%s358]
                %370 = vst [vmem:[%s366 + $0x40] sm:%s358] %v369
              $region133: #{fno3d_backbone_forward.13} parent=127 // loop_footer
                %s364 = sadd.s32 1, %s360
              $region134: #{fno3d_backbone_forward.13} parent=127 // loop_footer_branch
                %359 = sbr.rel target = $region130
              $region135: #{fno3d_backbone_forward.13} parent=127 // loop_exit
                _
            $region128: #{fno3d_backbone_forward.13} parent=119 // pred_fallthru
              _
          $region120: #{fno3d_backbone_forward.13} parent=115 // pred_fallthru
            _
          %387 = vnop
        $region116: #{fno3d_backbone_forward.13} parent=103 // pred_fallthru
          _
      $region104: #{fno3d_backbone_forward.13} parent=5 // pred_fallthru
        _
      %p388 = scmp.le.s32.totalorder 2, %s10
      // Predicated region
      $region151: #{fno3d_backbone_forward.13} parent=5 // pred_check
        %p389 = pneg %p388
      $region152: #{fno3d_backbone_forward.13} parent=5 // pred_check_branch
        %391 = sbr.rel (%p389) target = $region154
      $region153: #{fno3d_backbone_forward.13} parent=5 // pred_region
        %s392 = ssub.s32 %s10, 2
        // Predicated region
        $region155: #{fno3d_backbone_forward.13} parent=153 // pred_check
          %p393 = pneg %p133
        $region156: #{fno3d_backbone_forward.13} parent=153 // pred_check_branch
          %395 = sbr.rel (%p393) target = $region158
        $region157: #{fno3d_backbone_forward.13} parent=153 // pred_region
          %s396 = sand.u32 %s118, 1
          %s397 = sand.u32 %s118, 1
          %s398 = smul.addr %s397, 16
          %s399 = scalar_lea.vmem [#allocation4], %s398
        $region158: #{fno3d_backbone_forward.13} parent=153 // pred_fallthru
          _
      $region154: #{fno3d_backbone_forward.13} parent=5 // pred_fallthru
        _
    $region6: #{fno3d_backbone_forward.13} parent=1 // loop_footer
      %s14 = sadd.s32 1, %s10
    $region7: #{fno3d_backbone_forward.13} parent=1 // loop_footer_branch
      %9 = sbr.rel target = $region3
    $region8: #{fno3d_backbone_forward.13} parent=1 // loop_exit
      _

</llo_original>
